<compile_context>
chip_gen: v6e
topology: v6e:2x2x1
jax: 0.10.0
libtpu: 0.0.40
codegen_flags: <defaults>
</compile_context>

<pallas_src>
import math
from functools import partial

import jax
import jax.numpy as jnp
import numpy as np
from jax.experimental import pallas as pl
from jax.experimental.pallas import tpu as pltpu


def _mab_kernel(q_ref, k_ref, wq_ref, bq_ref, wk_ref, bk_ref,
                wv_ref, bv_ref, woq_ref, wot_ref, bo_ref, o_ref, *, num_heads):
    TB, Nq, dim_Q = q_ref.shape
    _, Nk, dim_K = k_ref.shape
    dim_V = wq_ref.shape[-1]
    ds = dim_V // num_heads
    scale = 1.0 / math.sqrt(ds)
    cdt = q_ref.dtype                  # MXU operand dtype (bf16 stays bf16)

    # Flatten batch*seq so the projection matmuls present large M tiles.
    Q2 = q_ref[...].reshape(TB * Nq, dim_Q)
    K2 = k_ref[...].reshape(TB * Nk, dim_K)

    # Projections with f32 accumulation.
    Qp = jnp.dot(Q2, wq_ref[...], preferred_element_type=jnp.float32) + bq_ref[...]
    Kp = jnp.dot(K2, wk_ref[...], preferred_element_type=jnp.float32) + bk_ref[...]
    Vp = jnp.dot(K2, wv_ref[...], preferred_element_type=jnp.float32) + bv_ref[...]

    # Cast MXU operands once (hoisted out of the head loop).
    Qc = Qp.astype(cdt).reshape(TB, Nq, dim_V)
    Kc = Kp.astype(cdt).reshape(TB, Nk, dim_V)
    Vc = Vp.astype(cdt).reshape(TB, Nk, dim_V)

    # Residual (+Qp) and its fc_o image folded into one matmul:
    #   O = Qp @ (wo^T + I) + bo  [+ per-head PV_h @ wo^T[h] below]
    O = jnp.dot(Qp.astype(cdt), woq_ref[...],
                preferred_element_type=jnp.float32) + bo_ref[...]   # (TB*Nq, dim_V) f32

    wot = wot_ref[...]                                              # (dim_V, dim_V)

    for h in range(num_heads):
        sl = slice(h * ds, (h + 1) * ds)
        Qh = Qc[:, :, sl]                                           # (TB, Nq, ds)
        Kh = Kc[:, :, sl]                                           # (TB, Nk, ds)
        Vh = Vc[:, :, sl]                                           # (TB, Nk, ds)

        # Scores via last-dim contraction (no explicit transpose).
        S = jnp.einsum('bqd,bkd->bqk', Qh, Kh,
                       preferred_element_type=jnp.float32) * scale
        S = S - jnp.max(S, axis=-1, keepdims=True)
        P = jnp.exp(S)
        A = P / jnp.sum(P, axis=-1, keepdims=True)                  # exact softmax
        # Dropout(A) == identity in eval mode.

        PV = jnp.einsum('bqk,bkd->bqd', A.astype(cdt), Vh,
                        preferred_element_type=jnp.float32)         # (TB, Nq, ds)

        # Fold fc_o: accumulate this head's slice of the output projection.
        O = O + jnp.dot(PV.reshape(TB * Nq, ds).astype(cdt), wot[sl, :],
                        preferred_element_type=jnp.float32)

    o_ref[...] = O.reshape(TB, Nq, dim_V).astype(o_ref.dtype)


def _is_multi_tensorcore_chip():
    """v7x exposes 2 TensorCores per chip; v5e/v6e have 1."""
    try:
        kind = jax.devices()[0].device_kind.lower()
    except Exception:
        return False
    return ("v7" in kind) or ("7x" in kind)


def _pick_tb(B, Nq, Nk, *, target_rows=2048, multi_core=False):
    """Largest batch tile with TB*max(Nq,Nk) <= target_rows rows per grid step.
    Prefers an exact divisor of B (no batch padding) when one exists that is at
    least half the cap. On multi-TensorCore chips (v7x), a single full-batch
    step is split into two 'parallel' steps only if each half keeps >=512 rows."""
    rows = max(Nq, Nk, 1)
    cap = max(1, target_rows // rows)
    tb = min(B, cap)
    divs = [d for d in range(1, tb + 1) if B % d == 0]
    best_div = max(divs) if divs else 1
    if 2 * best_div >= tb:
        tb = best_div                      # avoid batch padding when nearly as big
    if multi_core and tb >= B:
        half = -(-B // 2)
        if half * Nq >= 512:
            tb = half
    return max(1, tb)


def mab_forward(Q, K, params, num_heads=4, block_b=None):
    B, Nq, dim_Q = Q.shape
    Bk, Nk, dim_K = K.shape
    assert B == Bk
    dim_V = params["wq"].shape[0]
    assert dim_V % num_heads == 0
    cdt = Q.dtype

    # Weights as (in, out) so the kernel computes x @ W. Biases kept in f32
    # (they are added to f32 accumulators).
    wq = params["wq"].T.astype(cdt)                       # (dim_Q, dim_V)
    wk = params["wk"].T.astype(cdt)                       # (dim_K, dim_V)
    wv = params["wv"].T.astype(cdt)                       # (dim_K, dim_V)
    wot = params["wo"].T.astype(cdt)                      # (dim_V, dim_V) = wo^T
    woq = (params["wo"].T
           + jnp.eye(dim_V, dtype=params["wo"].dtype)).astype(cdt)  # wo^T + I
    bq = params["bq"].reshape(1, dim_V).astype(jnp.float32)
    bk = params["bk"].reshape(1, dim_V).astype(jnp.float32)
    bv = params["bv"].reshape(1, dim_V).astype(jnp.float32)
    bo = params["bo"].reshape(1, dim_V).astype(jnp.float32)

    if block_b is None:
        TB = _pick_tb(B, Nq, Nk, multi_core=_is_multi_tensorcore_chip())
    else:
        TB = max(1, min(block_b, B))
    steps = pl.cdiv(B, TB)
    Bp = steps * TB
    if Bp != B:
        # Pad awkward batch sizes with zero rows instead of degenerating into
        # many tiny grid steps; padded rows are sliced off below.
        Q = jnp.pad(Q, ((0, Bp - B), (0, 0), (0, 0)))
        K = jnp.pad(K, ((0, Bp - B), (0, 0), (0, 0)))

    full2d = lambda shape: pl.BlockSpec(shape, lambda b: (0, 0))

    out = pl.pallas_call(
        partial(_mab_kernel, num_heads=num_heads),
        out_shape=jax.ShapeDtypeStruct((Bp, Nq, dim_V), Q.dtype),
        grid_spec=pltpu.PrefetchScalarGridSpec(
            num_scalar_prefetch=0,
            grid=(steps,),
            in_specs=[
                pl.BlockSpec((TB, Nq, dim_Q), lambda b: (b, 0, 0)),
                pl.BlockSpec((TB, Nk, dim_K), lambda b: (b, 0, 0)),
                full2d((dim_Q, dim_V)), full2d((1, dim_V)),
                full2d((dim_K, dim_V)), full2d((1, dim_V)),
                full2d((dim_K, dim_V)), full2d((1, dim_V)),
                full2d((dim_V, dim_V)), full2d((dim_V, dim_V)),
                full2d((1, dim_V)),
            ],
            out_specs=pl.BlockSpec((TB, Nq, dim_V), lambda b: (b, 0, 0)),
        ),
        compiler_params=pltpu.CompilerParams(
            dimension_semantics=("parallel",)),
        # VMEM per step is well under the default scoped limit at these sizes;
        # set vmem_limit_bytes here only if TB / dim_V are scaled way up.
    )(Q, K, wq, bq, wk, bk, wv, bv, woq, wot, bo)

    return out[:B] if Bp != B else out


def mab_reference_np(Q, K, p, num_heads):
    """NumPy float64 reference mirroring the PyTorch forward (ln=False, eval)."""
    f64 = lambda a: np.asarray(a, np.float64)
    Q, K = f64(Q), f64(K)
    wq, bq = f64(p["wq"]), f64(p["bq"])
    wk, bk = f64(p["wk"]), f64(p["bk"])
    wv, bv = f64(p["wv"]), f64(p["bv"])
    wo, bo = f64(p["wo"]), f64(p["bo"])
    Qp = Q @ wq.T + bq
    Kp = K @ wk.T + bk
    Vp = K @ wv.T + bv
    B, Nq, dV = Qp.shape
    Nk = Kp.shape[1]
    ds = dV // num_heads
    Qh = Qp.reshape(B, Nq, num_heads, ds).transpose(0, 2, 1, 3)
    Kh = Kp.reshape(B, Nk, num_heads, ds).transpose(0, 2, 1, 3)
    Vh = Vp.reshape(B, Nk, num_heads, ds).transpose(0, 2, 1, 3)
    S = np.einsum("bhqd,bhkd->bhqk", Qh, Kh) / math.sqrt(ds)
    S = S - S.max(-1, keepdims=True)
    P = np.exp(S)
    A = P / P.sum(-1, keepdims=True)
    Oh = Qh + np.einsum("bhqk,bhkd->bhqd", A, Vh)
    Oc = Oh.transpose(0, 2, 1, 3).reshape(B, Nq, dV)
    return Oc @ wo.T + bo + Qp


if __name__ == "__main__":
    # Small shapes consistent with the module's forward.
    B, Nq, Nk = 2, 8, 16
    dim_Q, dim_K, dim_V, H = 16, 24, 32, 4

    key = jax.random.PRNGKey(0)
    ks = jax.random.split(key, 10)

    def lin_init(kw, kb, out_f, in_f):
        bound = 1.0 / math.sqrt(in_f)
        w = jax.random.uniform(kw, (out_f, in_f), jnp.float32, -bound, bound)
        b = jax.random.uniform(kb, (out_f,), jnp.float32, -bound, bound)
        return w, b

    wq, bq = lin_init(ks[0], ks[1], dim_V, dim_Q)
    wk, bk = lin_init(ks[2], ks[3], dim_V, dim_K)
    wv, bv = lin_init(ks[4], ks[5], dim_V, dim_K)
    wo, bo = lin_init(ks[6], ks[7], dim_V, dim_V)
    params = dict(wq=wq, bq=bq, wk=wk, bk=bk, wv=wv, bv=bv, wo=wo, bo=bo)

    Q = jax.random.normal(ks[8], (B, Nq, dim_Q), jnp.float32)
    K = jax.random.normal(ks[9], (B, Nk, dim_K), jnp.float32)

    out = mab_forward(Q, K, params, num_heads=H)
    out = jax.block_until_ready(out)

    ref = mab_reference_np(np.asarray(Q), np.asarray(K),
                           {k: np.asarray(v) for k, v in params.items()}, H)
    assert out.shape == (B, Nq, dim_V)
    # f32 compute end-to-end with exact softmax division; 5e-3 comfortably
    # covers f32 matmul accumulation-order differences vs the f64 reference.
    assert np.allclose(np.asarray(out), ref, rtol=5e-3, atol=5e-3)

    print("KERNEL_OK")
</pallas_src>

<mosaic_0001>
module attributes {stable_mosaic.version = 11 : i64} {
  func.func @_mab_kernel(%arg0: i32, %arg1: memref<2x8x16xf32, #tpu.memory_space<vmem>>, %arg2: memref<2x16x24xf32, #tpu.memory_space<vmem>>, %arg3: memref<16x32xf32, #tpu.memory_space<vmem>>, %arg4: memref<1x32xf32, #tpu.memory_space<vmem>>, %arg5: memref<24x32xf32, #tpu.memory_space<vmem>>, %arg6: memref<1x32xf32, #tpu.memory_space<vmem>>, %arg7: memref<24x32xf32, #tpu.memory_space<vmem>>, %arg8: memref<1x32xf32, #tpu.memory_space<vmem>>, %arg9: memref<32x32xf32, #tpu.memory_space<vmem>>, %arg10: memref<32x32xf32, #tpu.memory_space<vmem>>, %arg11: memref<1x32xf32, #tpu.memory_space<vmem>>, %arg12: memref<2x8x32xf32, #tpu.memory_space<vmem>>) attributes {dimension_semantics = [#tpu.dimension_semantics<parallel>], iteration_bounds = array<i64: 1>, scalar_prefetch = 0 : i64, scratch_operands = 0 : i64, tpu.core_type = #tpu.core_type<tc>, window_params = [{transform_indices = @transform_0, window_bounds = array<i64: 2, 8, 16>}, {transform_indices = @transform_1, window_bounds = array<i64: 2, 16, 24>}, {pipeline_mode = #tpu.pipeline_mode<synchronous>, transform_indices = @transform_2, window_bounds = array<i64: 16, 32>}, {pipeline_mode = #tpu.pipeline_mode<synchronous>, transform_indices = @transform_3, window_bounds = array<i64: 1, 32>}, {pipeline_mode = #tpu.pipeline_mode<synchronous>, transform_indices = @transform_4, window_bounds = array<i64: 24, 32>}, {pipeline_mode = #tpu.pipeline_mode<synchronous>, transform_indices = @transform_5, window_bounds = array<i64: 1, 32>}, {pipeline_mode = #tpu.pipeline_mode<synchronous>, transform_indices = @transform_6, window_bounds = array<i64: 24, 32>}, {pipeline_mode = #tpu.pipeline_mode<synchronous>, transform_indices = @transform_7, window_bounds = array<i64: 1, 32>}, {pipeline_mode = #tpu.pipeline_mode<synchronous>, transform_indices = @transform_8, window_bounds = array<i64: 32, 32>}, {pipeline_mode = #tpu.pipeline_mode<synchronous>, transform_indices = @transform_9, window_bounds = array<i64: 32, 32>}, {pipeline_mode = #tpu.pipeline_mode<synchronous>, transform_indices = @transform_10, window_bounds = array<i64: 1, 32>}, {transform_indices = @transform_11, window_bounds = array<i64: 2, 8, 32>}]} {
    %c0 = arith.constant 0 : index
    %c0_0 = arith.constant 0 : index
    %c0_1 = arith.constant 0 : index
    %0 = vector.load %arg1[%c0, %c0_0, %c0_1] : memref<2x8x16xf32, #tpu.memory_space<vmem>>, vector<2x8x16xf32>
    %1 = vector.shape_cast %0 : vector<2x8x16xf32> to vector<16x16xf32>
    %c0_2 = arith.constant 0 : index
    %c0_3 = arith.constant 0 : index
    %c0_4 = arith.constant 0 : index
    %2 = vector.load %arg2[%c0_2, %c0_3, %c0_4] : memref<2x16x24xf32, #tpu.memory_space<vmem>>, vector<2x16x24xf32>
    %3 = vector.shape_cast %2 : vector<2x16x24xf32> to vector<32x24xf32>
    %c0_5 = arith.constant 0 : index
    %c0_6 = arith.constant 0 : index
    %4 = vector.load %arg3[%c0_5, %c0_6] : memref<16x32xf32, #tpu.memory_space<vmem>>, vector<16x32xf32>
    %cst = arith.constant dense<0.000000e+00> : vector<16x32xf32>
    %5 = tpu.matmul %1, %4, %cst {dimension_numbers = #tpu.dot_dimension_numbers<[1], [0], [0], [1], [0, 0, 1, 1], [], []>} : vector<16x16xf32>, vector<16x32xf32>, vector<16x32xf32> -> vector<16x32xf32>
    %c0_7 = arith.constant 0 : index
    %c0_8 = arith.constant 0 : index
    %6 = vector.load %arg4[%c0_7, %c0_8] : memref<1x32xf32, #tpu.memory_space<vmem>>, vector<1x32xf32>
    %7 = vector.broadcast %6 : vector<1x32xf32> to vector<16x32xf32>
    %8 = arith.addf %5, %7 : vector<16x32xf32>
    %c0_9 = arith.constant 0 : index
    %c0_10 = arith.constant 0 : index
    %9 = vector.load %arg5[%c0_9, %c0_10] : memref<24x32xf32, #tpu.memory_space<vmem>>, vector<24x32xf32>
    %cst_11 = arith.constant dense<0.000000e+00> : vector<32x32xf32>
    %10 = tpu.matmul %3, %9, %cst_11 {dimension_numbers = #tpu.dot_dimension_numbers<[1], [0], [0], [1], [0, 0, 1, 1], [], []>} : vector<32x24xf32>, vector<24x32xf32>, vector<32x32xf32> -> vector<32x32xf32>
    %c0_12 = arith.constant 0 : index
    %c0_13 = arith.constant 0 : index
    %11 = vector.load %arg6[%c0_12, %c0_13] : memref<1x32xf32, #tpu.memory_space<vmem>>, vector<1x32xf32>
    %12 = vector.broadcast %11 : vector<1x32xf32> to vector<32x32xf32>
    %13 = arith.addf %10, %12 : vector<32x32xf32>
    %c0_14 = arith.constant 0 : index
    %c0_15 = arith.constant 0 : index
    %14 = vector.load %arg7[%c0_14, %c0_15] : memref<24x32xf32, #tpu.memory_space<vmem>>, vector<24x32xf32>
    %cst_16 = arith.constant dense<0.000000e+00> : vector<32x32xf32>
    %15 = tpu.matmul %3, %14, %cst_16 {dimension_numbers = #tpu.dot_dimension_numbers<[1], [0], [0], [1], [0, 0, 1, 1], [], []>} : vector<32x24xf32>, vector<24x32xf32>, vector<32x32xf32> -> vector<32x32xf32>
    %c0_17 = arith.constant 0 : index
    %c0_18 = arith.constant 0 : index
    %16 = vector.load %arg8[%c0_17, %c0_18] : memref<1x32xf32, #tpu.memory_space<vmem>>, vector<1x32xf32>
    %17 = vector.broadcast %16 : vector<1x32xf32> to vector<32x32xf32>
    %18 = arith.addf %15, %17 : vector<32x32xf32>
    %19 = vector.shape_cast %8 : vector<16x32xf32> to vector<2x8x32xf32>
    %20 = vector.shape_cast %13 : vector<32x32xf32> to vector<2x16x32xf32>
    %21 = vector.shape_cast %18 : vector<32x32xf32> to vector<2x16x32xf32>
    %c0_19 = arith.constant 0 : index
    %c0_20 = arith.constant 0 : index
    %22 = vector.load %arg9[%c0_19, %c0_20] : memref<32x32xf32, #tpu.memory_space<vmem>>, vector<32x32xf32>
    %cst_21 = arith.constant dense<0.000000e+00> : vector<16x32xf32>
    %23 = tpu.matmul %8, %22, %cst_21 {dimension_numbers = #tpu.dot_dimension_numbers<[1], [0], [0], [1], [0, 0, 1, 1], [], []>} : vector<16x32xf32>, vector<32x32xf32>, vector<16x32xf32> -> vector<16x32xf32>
    %c0_22 = arith.constant 0 : index
    %c0_23 = arith.constant 0 : index
    %24 = vector.load %arg11[%c0_22, %c0_23] : memref<1x32xf32, #tpu.memory_space<vmem>>, vector<1x32xf32>
    %25 = vector.broadcast %24 : vector<1x32xf32> to vector<16x32xf32>
    %26 = arith.addf %23, %25 : vector<16x32xf32>
    %c0_24 = arith.constant 0 : index
    %c0_25 = arith.constant 0 : index
    %27 = vector.load %arg10[%c0_24, %c0_25] : memref<32x32xf32, #tpu.memory_space<vmem>>, vector<32x32xf32>
    %28 = vector.extract_strided_slice %19 {offsets = [0, 0, 0], sizes = [2, 8, 8], strides = [1, 1, 1]} : vector<2x8x32xf32> to vector<2x8x8xf32>
    %29 = vector.extract_strided_slice %20 {offsets = [0, 0, 0], sizes = [2, 16, 8], strides = [1, 1, 1]} : vector<2x16x32xf32> to vector<2x16x8xf32>
    %30 = vector.extract_strided_slice %21 {offsets = [0, 0, 0], sizes = [2, 16, 8], strides = [1, 1, 1]} : vector<2x16x32xf32> to vector<2x16x8xf32>
    "tpu.trace_start"() <{level = 10 : i32, message = "bqd,bkd->bqk"}> : () -> ()
    %cst_26 = arith.constant dense<0.000000e+00> : vector<2x8x16xf32>
    %31 = tpu.matmul %28, %29, %cst_26 {dimension_numbers = #tpu.dot_dimension_numbers<[2], [2], [1], [1], [0, 0, 0, 1, 1, 1], [0], [0]>} : vector<2x8x8xf32>, vector<2x16x8xf32>, vector<2x8x16xf32> -> vector<2x8x16xf32>
    "tpu.trace_stop"() : () -> ()
    %cst_27 = arith.constant 0.353553385 : f32
    %32 = vector.broadcast %cst_27 : f32 to vector<2x8x16xf32>
    %33 = arith.mulf %31, %32 : vector<2x8x16xf32>
    %cst_28 = arith.constant dense<0xFF800000> : vector<2x8xf32>
    %34 = vector.multi_reduction <maximumf>, %33, %cst_28 [2] : vector<2x8x16xf32> to vector<2x8xf32>
    %35 = vector.shape_cast %34 : vector<2x8xf32> to vector<2x8x1xf32>
    %36 = vector.broadcast %35 : vector<2x8x1xf32> to vector<2x8x16xf32>
    %37 = arith.subf %33, %36 : vector<2x8x16xf32>
    %38 = math.exp %37 : vector<2x8x16xf32>
    %cst_29 = arith.constant dense<0.000000e+00> : vector<2x8xf32>
    %39 = vector.multi_reduction <add>, %38, %cst_29 [2] : vector<2x8x16xf32> to vector<2x8xf32>
    %40 = vector.shape_cast %39 : vector<2x8xf32> to vector<2x8x1xf32>
    %41 = vector.broadcast %40 : vector<2x8x1xf32> to vector<2x8x16xf32>
    %42 = arith.divf %38, %41 : vector<2x8x16xf32>
    "tpu.trace_start"() <{level = 10 : i32, message = "bqk,bkd->bqd"}> : () -> ()
    %cst_30 = arith.constant dense<0.000000e+00> : vector<2x8x8xf32>
    %43 = tpu.matmul %42, %30, %cst_30 {dimension_numbers = #tpu.dot_dimension_numbers<[2], [1], [1], [2], [0, 0, 0, 1, 1, 2], [0], [0]>} : vector<2x8x16xf32>, vector<2x16x8xf32>, vector<2x8x8xf32> -> vector<2x8x8xf32>
    "tpu.trace_stop"() : () -> ()
    %44 = vector.shape_cast %43 : vector<2x8x8xf32> to vector<16x8xf32>
    %45 = vector.extract_strided_slice %27 {offsets = [0, 0], sizes = [8, 32], strides = [1, 1]} : vector<32x32xf32> to vector<8x32xf32>
    %cst_31 = arith.constant dense<0.000000e+00> : vector<16x32xf32>
    %46 = tpu.matmul %44, %45, %cst_31 {dimension_numbers = #tpu.dot_dimension_numbers<[1], [0], [0], [1], [0, 0, 1, 1], [], []>} : vector<16x8xf32>, vector<8x32xf32>, vector<16x32xf32> -> vector<16x32xf32>
    %47 = arith.addf %26, %46 : vector<16x32xf32>
    %48 = vector.extract_strided_slice %19 {offsets = [0, 0, 8], sizes = [2, 8, 8], strides = [1, 1, 1]} : vector<2x8x32xf32> to vector<2x8x8xf32>
    %49 = vector.extract_strided_slice %20 {offsets = [0, 0, 8], sizes = [2, 16, 8], strides = [1, 1, 1]} : vector<2x16x32xf32> to vector<2x16x8xf32>
    %50 = vector.extract_strided_slice %21 {offsets = [0, 0, 8], sizes = [2, 16, 8], strides = [1, 1, 1]} : vector<2x16x32xf32> to vector<2x16x8xf32>
    "tpu.trace_start"() <{level = 10 : i32, message = "bqd,bkd->bqk"}> : () -> ()
    %cst_32 = arith.constant dense<0.000000e+00> : vector<2x8x16xf32>
    %51 = tpu.matmul %48, %49, %cst_32 {dimension_numbers = #tpu.dot_dimension_numbers<[2], [2], [1], [1], [0, 0, 0, 1, 1, 1], [0], [0]>} : vector<2x8x8xf32>, vector<2x16x8xf32>, vector<2x8x16xf32> -> vector<2x8x16xf32>
    "tpu.trace_stop"() : () -> ()
    %cst_33 = arith.constant 0.353553385 : f32
    %52 = vector.broadcast %cst_33 : f32 to vector<2x8x16xf32>
    %53 = arith.mulf %51, %52 : vector<2x8x16xf32>
    %cst_34 = arith.constant dense<0xFF800000> : vector<2x8xf32>
    %54 = vector.multi_reduction <maximumf>, %53, %cst_34 [2] : vector<2x8x16xf32> to vector<2x8xf32>
    %55 = vector.shape_cast %54 : vector<2x8xf32> to vector<2x8x1xf32>
    %56 = vector.broadcast %55 : vector<2x8x1xf32> to vector<2x8x16xf32>
    %57 = arith.subf %53, %56 : vector<2x8x16xf32>
    %58 = math.exp %57 : vector<2x8x16xf32>
    %cst_35 = arith.constant dense<0.000000e+00> : vector<2x8xf32>
    %59 = vector.multi_reduction <add>, %58, %cst_35 [2] : vector<2x8x16xf32> to vector<2x8xf32>
    %60 = vector.shape_cast %59 : vector<2x8xf32> to vector<2x8x1xf32>
    %61 = vector.broadcast %60 : vector<2x8x1xf32> to vector<2x8x16xf32>
    %62 = arith.divf %58, %61 : vector<2x8x16xf32>
    "tpu.trace_start"() <{level = 10 : i32, message = "bqk,bkd->bqd"}> : () -> ()
    %cst_36 = arith.constant dense<0.000000e+00> : vector<2x8x8xf32>
    %63 = tpu.matmul %62, %50, %cst_36 {dimension_numbers = #tpu.dot_dimension_numbers<[2], [1], [1], [2], [0, 0, 0, 1, 1, 2], [0], [0]>} : vector<2x8x16xf32>, vector<2x16x8xf32>, vector<2x8x8xf32> -> vector<2x8x8xf32>
    "tpu.trace_stop"() : () -> ()
    %64 = vector.shape_cast %63 : vector<2x8x8xf32> to vector<16x8xf32>
    %65 = vector.extract_strided_slice %27 {offsets = [8, 0], sizes = [8, 32], strides = [1, 1]} : vector<32x32xf32> to vector<8x32xf32>
    %cst_37 = arith.constant dense<0.000000e+00> : vector<16x32xf32>
    %66 = tpu.matmul %64, %65, %cst_37 {dimension_numbers = #tpu.dot_dimension_numbers<[1], [0], [0], [1], [0, 0, 1, 1], [], []>} : vector<16x8xf32>, vector<8x32xf32>, vector<16x32xf32> -> vector<16x32xf32>
    %67 = arith.addf %47, %66 : vector<16x32xf32>
    %68 = vector.extract_strided_slice %19 {offsets = [0, 0, 16], sizes = [2, 8, 8], strides = [1, 1, 1]} : vector<2x8x32xf32> to vector<2x8x8xf32>
    %69 = vector.extract_strided_slice %20 {offsets = [0, 0, 16], sizes = [2, 16, 8], strides = [1, 1, 1]} : vector<2x16x32xf32> to vector<2x16x8xf32>
    %70 = vector.extract_strided_slice %21 {offsets = [0, 0, 16], sizes = [2, 16, 8], strides = [1, 1, 1]} : vector<2x16x32xf32> to vector<2x16x8xf32>
    "tpu.trace_start"() <{level = 10 : i32, message = "bqd,bkd->bqk"}> : () -> ()
    %cst_38 = arith.constant dense<0.000000e+00> : vector<2x8x16xf32>
    %71 = tpu.matmul %68, %69, %cst_38 {dimension_numbers = #tpu.dot_dimension_numbers<[2], [2], [1], [1], [0, 0, 0, 1, 1, 1], [0], [0]>} : vector<2x8x8xf32>, vector<2x16x8xf32>, vector<2x8x16xf32> -> vector<2x8x16xf32>
    "tpu.trace_stop"() : () -> ()
    %cst_39 = arith.constant 0.353553385 : f32
    %72 = vector.broadcast %cst_39 : f32 to vector<2x8x16xf32>
    %73 = arith.mulf %71, %72 : vector<2x8x16xf32>
    %cst_40 = arith.constant dense<0xFF800000> : vector<2x8xf32>
    %74 = vector.multi_reduction <maximumf>, %73, %cst_40 [2] : vector<2x8x16xf32> to vector<2x8xf32>
    %75 = vector.shape_cast %74 : vector<2x8xf32> to vector<2x8x1xf32>
    %76 = vector.broadcast %75 : vector<2x8x1xf32> to vector<2x8x16xf32>
    %77 = arith.subf %73, %76 : vector<2x8x16xf32>
    %78 = math.exp %77 : vector<2x8x16xf32>
    %cst_41 = arith.constant dense<0.000000e+00> : vector<2x8xf32>
    %79 = vector.multi_reduction <add>, %78, %cst_41 [2] : vector<2x8x16xf32> to vector<2x8xf32>
    %80 = vector.shape_cast %79 : vector<2x8xf32> to vector<2x8x1xf32>
    %81 = vector.broadcast %80 : vector<2x8x1xf32> to vector<2x8x16xf32>
    %82 = arith.divf %78, %81 : vector<2x8x16xf32>
    "tpu.trace_start"() <{level = 10 : i32, message = "bqk,bkd->bqd"}> : () -> ()
    %cst_42 = arith.constant dense<0.000000e+00> : vector<2x8x8xf32>
    %83 = tpu.matmul %82, %70, %cst_42 {dimension_numbers = #tpu.dot_dimension_numbers<[2], [1], [1], [2], [0, 0, 0, 1, 1, 2], [0], [0]>} : vector<2x8x16xf32>, vector<2x16x8xf32>, vector<2x8x8xf32> -> vector<2x8x8xf32>
    "tpu.trace_stop"() : () -> ()
    %84 = vector.shape_cast %83 : vector<2x8x8xf32> to vector<16x8xf32>
    %85 = vector.extract_strided_slice %27 {offsets = [16, 0], sizes = [8, 32], strides = [1, 1]} : vector<32x32xf32> to vector<8x32xf32>
    %cst_43 = arith.constant dense<0.000000e+00> : vector<16x32xf32>
    %86 = tpu.matmul %84, %85, %cst_43 {dimension_numbers = #tpu.dot_dimension_numbers<[1], [0], [0], [1], [0, 0, 1, 1], [], []>} : vector<16x8xf32>, vector<8x32xf32>, vector<16x32xf32> -> vector<16x32xf32>
    %87 = arith.addf %67, %86 : vector<16x32xf32>
    %88 = vector.extract_strided_slice %19 {offsets = [0, 0, 24], sizes = [2, 8, 8], strides = [1, 1, 1]} : vector<2x8x32xf32> to vector<2x8x8xf32>
    %89 = vector.extract_strided_slice %20 {offsets = [0, 0, 24], sizes = [2, 16, 8], strides = [1, 1, 1]} : vector<2x16x32xf32> to vector<2x16x8xf32>
    %90 = vector.extract_strided_slice %21 {offsets = [0, 0, 24], sizes = [2, 16, 8], strides = [1, 1, 1]} : vector<2x16x32xf32> to vector<2x16x8xf32>
    "tpu.trace_start"() <{level = 10 : i32, message = "bqd,bkd->bqk"}> : () -> ()
    %cst_44 = arith.constant dense<0.000000e+00> : vector<2x8x16xf32>
    %91 = tpu.matmul %88, %89, %cst_44 {dimension_numbers = #tpu.dot_dimension_numbers<[2], [2], [1], [1], [0, 0, 0, 1, 1, 1], [0], [0]>} : vector<2x8x8xf32>, vector<2x16x8xf32>, vector<2x8x16xf32> -> vector<2x8x16xf32>
    "tpu.trace_stop"() : () -> ()
    %cst_45 = arith.constant 0.353553385 : f32
    %92 = vector.broadcast %cst_45 : f32 to vector<2x8x16xf32>
    %93 = arith.mulf %91, %92 : vector<2x8x16xf32>
    %cst_46 = arith.constant dense<0xFF800000> : vector<2x8xf32>
    %94 = vector.multi_reduction <maximumf>, %93, %cst_46 [2] : vector<2x8x16xf32> to vector<2x8xf32>
    %95 = vector.shape_cast %94 : vector<2x8xf32> to vector<2x8x1xf32>
    %96 = vector.broadcast %95 : vector<2x8x1xf32> to vector<2x8x16xf32>
    %97 = arith.subf %93, %96 : vector<2x8x16xf32>
    %98 = math.exp %97 : vector<2x8x16xf32>
    %cst_47 = arith.constant dense<0.000000e+00> : vector<2x8xf32>
    %99 = vector.multi_reduction <add>, %98, %cst_47 [2] : vector<2x8x16xf32> to vector<2x8xf32>
    %100 = vector.shape_cast %99 : vector<2x8xf32> to vector<2x8x1xf32>
    %101 = vector.broadcast %100 : vector<2x8x1xf32> to vector<2x8x16xf32>
    %102 = arith.divf %98, %101 : vector<2x8x16xf32>
    "tpu.trace_start"() <{level = 10 : i32, message = "bqk,bkd->bqd"}> : () -> ()
    %cst_48 = arith.constant dense<0.000000e+00> : vector<2x8x8xf32>
    %103 = tpu.matmul %102, %90, %cst_48 {dimension_numbers = #tpu.dot_dimension_numbers<[2], [1], [1], [2], [0, 0, 0, 1, 1, 2], [0], [0]>} : vector<2x8x16xf32>, vector<2x16x8xf32>, vector<2x8x8xf32> -> vector<2x8x8xf32>
    "tpu.trace_stop"() : () -> ()
    %104 = vector.shape_cast %103 : vector<2x8x8xf32> to vector<16x8xf32>
    %105 = vector.extract_strided_slice %27 {offsets = [24, 0], sizes = [8, 32], strides = [1, 1]} : vector<32x32xf32> to vector<8x32xf32>
    %cst_49 = arith.constant dense<0.000000e+00> : vector<16x32xf32>
    %106 = tpu.matmul %104, %105, %cst_49 {dimension_numbers = #tpu.dot_dimension_numbers<[1], [0], [0], [1], [0, 0, 1, 1], [], []>} : vector<16x8xf32>, vector<8x32xf32>, vector<16x32xf32> -> vector<16x32xf32>
    %107 = arith.addf %87, %106 : vector<16x32xf32>
    %108 = vector.shape_cast %107 : vector<16x32xf32> to vector<2x8x32xf32>
    %c0_50 = arith.constant 0 : index
    %c0_51 = arith.constant 0 : index
    %c0_52 = arith.constant 0 : index
    %109 = vector.load %arg12[%c0_50, %c0_51, %c0_52] : memref<2x8x32xf32, #tpu.memory_space<vmem>>, vector<2x8x32xf32>
    tpu.vector_store %arg12[%c0_50, %c0_51, %c0_52], %108 {strides = array<i32>} : memref<2x8x32xf32, #tpu.memory_space<vmem>>, vector<2x8x32xf32>,
    return
  }
  func.func @transform_0(%arg0: i32) -> (i32, i32, i32) {
    %c0_i32 = arith.constant 0 : i32
    %c0_i32_0 = arith.constant 0 : i32
    %c0_i32_1 = arith.constant 0 : i32
    return %arg0, %c0_i32, %c0_i32_0 : i32, i32, i32
  }
  func.func @transform_1(%arg0: i32) -> (i32, i32, i32) {
    %c0_i32 = arith.constant 0 : i32
    %c0_i32_0 = arith.constant 0 : i32
    %c0_i32_1 = arith.constant 0 : i32
    return %arg0, %c0_i32, %c0_i32_0 : i32, i32, i32
  }
  func.func @transform_2(%arg0: i32) -> (i32, i32) {
    %c0_i32 = arith.constant 0 : i32
    %c0_i32_0 = arith.constant 0 : i32
    %c0_i32_1 = arith.constant 0 : i32
    return %c0_i32, %c0_i32_0 : i32, i32
  }
  func.func @transform_3(%arg0: i32) -> (i32, i32) {
    %c0_i32 = arith.constant 0 : i32
    %c0_i32_0 = arith.constant 0 : i32
    %c0_i32_1 = arith.constant 0 : i32
    return %c0_i32, %c0_i32_0 : i32, i32
  }
  func.func @transform_4(%arg0: i32) -> (i32, i32) {
    %c0_i32 = arith.constant 0 : i32
    %c0_i32_0 = arith.constant 0 : i32
    %c0_i32_1 = arith.constant 0 : i32
    return %c0_i32, %c0_i32_0 : i32, i32
  }
  func.func @transform_5(%arg0: i32) -> (i32, i32) {
    %c0_i32 = arith.constant 0 : i32
    %c0_i32_0 = arith.constant 0 : i32
    %c0_i32_1 = arith.constant 0 : i32
    return %c0_i32, %c0_i32_0 : i32, i32
  }
  func.func @transform_6(%arg0: i32) -> (i32, i32) {
    %c0_i32 = arith.constant 0 : i32
    %c0_i32_0 = arith.constant 0 : i32
    %c0_i32_1 = arith.constant 0 : i32
    return %c0_i32, %c0_i32_0 : i32, i32
  }
  func.func @transform_7(%arg0: i32) -> (i32, i32) {
    %c0_i32 = arith.constant 0 : i32
    %c0_i32_0 = arith.constant 0 : i32
    %c0_i32_1 = arith.constant 0 : i32
    return %c0_i32, %c0_i32_0 : i32, i32
  }
  func.func @transform_8(%arg0: i32) -> (i32, i32) {
    %c0_i32 = arith.constant 0 : i32
    %c0_i32_0 = arith.constant 0 : i32
    %c0_i32_1 = arith.constant 0 : i32
    return %c0_i32, %c0_i32_0 : i32, i32
  }
  func.func @transform_9(%arg0: i32) -> (i32, i32) {
    %c0_i32 = arith.constant 0 : i32
    %c0_i32_0 = arith.constant 0 : i32
    %c0_i32_1 = arith.constant 0 : i32
    return %c0_i32, %c0_i32_0 : i32, i32
  }
  func.func @transform_10(%arg0: i32) -> (i32, i32) {
    %c0_i32 = arith.constant 0 : i32
    %c0_i32_0 = arith.constant 0 : i32
    %c0_i32_1 = arith.constant 0 : i32
    return %c0_i32, %c0_i32_0 : i32, i32
  }
  func.func @transform_11(%arg0: i32) -> (i32, i32, i32) {
    %c0_i32 = arith.constant 0 : i32
    %c0_i32_0 = arith.constant 0 : i32
    %c0_i32_1 = arith.constant 0 : i32
    return %arg0, %c0_i32, %c0_i32_0 : i32, i32, i32
  }
}

</mosaic_0001>

<llo_original>
// kernel: tpu_custom_call.1
$region0: #{tpu_custom_call.1}
  #allocation0 [shape = 'u32[]', space=smem, size = 0x4, offset = 0x4, fixed_abs, tag = 'smem constant byte address 0x4 - core index']
  #allocation1 [shape = 'u32[144,128]{1,0:T(1,128)}', space=vmem, size = 0x12000, scoped, tag = 'internal scratch']
  %s0 = inlined_call_operand.hbm [shape: f32[2,8,16], index: 0, kind: input, shape index: {}]
  %s1 = inlined_call_operand.hbm [shape: f32[2,16,24], index: 1, kind: input, shape index: {}]
  %s2 = inlined_call_operand.hbm [shape: f32[16,32], index: 2, kind: input, shape index: {}]
  %s3 = inlined_call_operand.vmem [shape: f32[1,32], index: 3, kind: input, shape index: {}]
  %s4 = inlined_call_operand.hbm [shape: f32[24,32], index: 4, kind: input, shape index: {}]
  %s5 = inlined_call_operand.vmem [shape: f32[1,32], index: 5, kind: input, shape index: {}]
  %s6 = inlined_call_operand.hbm [shape: f32[24,32], index: 6, kind: input, shape index: {}]
  %s7 = inlined_call_operand.vmem [shape: f32[1,32], index: 7, kind: input, shape index: {}]
  %s8 = inlined_call_operand.hbm [shape: f32[32,32], index: 8, kind: input, shape index: {}]
  %s9 = inlined_call_operand.hbm [shape: f32[32,32], index: 9, kind: input, shape index: {}]
  %s10 = inlined_call_operand.vmem [shape: f32[1,32], index: 10, kind: input, shape index: {}]
  %s11 = inlined_call_operand.hbm [shape: f32[2,8,32], index: 11, kind: output, shape index: {}]
  %s12 = sld [smem:[#allocation0]]
  $region82: #{tpu_custom_call.1} parent=0
    _
  %s14 = ssub.s32 1, %s12
  %s15 = scalar_select 0, %s14, %s12
  $region1: #{tpu_custom_call.1} parent=0
    #allocation2 [shape = 'u8[8192]{0}', space=vmem, size = 0x2000, scoped, tag = 'input window, operand 0, single buffered']
    #allocation3 [shape = 's32[1]{0}', space=sflag, size = 0x4, scoped, tag = 'scoped memory for tpu_custom_call.1']
    #allocation4 [shape = 's32[1]{0}', space=sflag, size = 0x4, scoped, tag = 'scoped memory for tpu_custom_call.1']
    #allocation5 [shape = 'u8[16384]{0}', space=vmem, size = 0x4000, scoped, tag = 'input window, operand 1, single buffered']
    #allocation6 [shape = 's32[1]{0}', space=sflag, size = 0x4, scoped, tag = 'scoped memory for tpu_custom_call.1']
    #allocation7 [shape = 'u8[8192]{0}', space=vmem, size = 0x2000, scoped, tag = 'input window, operand 2, single buffered']
    #allocation8 [shape = 'u8[12288]{0}', space=vmem, size = 0x3000, scoped, tag = 'input window, operand 4, single buffered']
    #allocation9 [shape = 's32[1]{0}', space=sflag, size = 0x4, scoped, tag = 'scoped memory for tpu_custom_call.1']
    #allocation10 [shape = 'u8[12288]{0}', space=vmem, size = 0x3000, scoped, tag = 'input window, operand 6, single buffered']
    #allocation11 [shape = 'u8[16384]{0}', space=vmem, size = 0x4000, scoped, tag = 'input window, operand 8, single buffered']
    #allocation12 [shape = 's32[1]{0}', space=sflag, size = 0x4, scoped, tag = 'scoped memory for tpu_custom_call.1']
    #allocation13 [shape = 'u8[16384]{0}', space=vmem, size = 0x4000, scoped, tag = 'input window, operand 9, single buffered']
    #allocation14 [shape = 'u8[8192]{0}', space=vmem, size = 0x2000, scoped, tag = 'output window, operand 0, single buffered']
    %16 = vsyncpa [#allocation3], 0
    %17 = vsyncpa [#allocation6], 0
    %18 = vsyncpa [#allocation9], 0
    %19 = vsyncpa [#allocation12], 0
    %20 = vsyncpa [#allocation4], 0
    // Predicated region
    $region2: #{tpu_custom_call.1} parent=1 // pred_check
      _
    $region3: #{tpu_custom_call.1} parent=1 // pred_check_branch
      %22 = sbr.rel (0) target = $region5
    $region4: #{tpu_custom_call.1} parent=1 // pred_region
      %s24 = ssub.s32 256, 256
      %25 = vsyncadd [#allocation3], %s24
      %s26 = sshll.u32 [#allocation2], 4
      %s27 = int_to_ptr.vmem [resolvable:$true] %s26
      %32 = dma.hbm_to_vmem [thread:$0]  %s0, 256, %s27, [#allocation3], 128, 128, 8
    $region5: #{tpu_custom_call.1} parent=1 // pred_fallthru
      _
    // Predicated region
    $region6: #{tpu_custom_call.1} parent=1 // pred_check
      _
    $region7: #{tpu_custom_call.1} parent=1 // pred_check_branch
      %34 = sbr.rel (0) target = $region9
    $region8: #{tpu_custom_call.1} parent=1 // pred_region
      %s36 = ssub.s32 512, 512
      %37 = vsyncadd [#allocation6], %s36
      %s38 = sshll.u32 [#allocation5], 4
      %s39 = int_to_ptr.vmem [resolvable:$true] %s38
      %44 = dma.hbm_to_vmem [thread:$0]  %s1, 512, %s39, [#allocation6], 128, 128, 8
    $region9: #{tpu_custom_call.1} parent=1 // pred_fallthru
      _
    // Predicated region
    $region10: #{tpu_custom_call.1} parent=1 // pred_check
      _
    $region11: #{tpu_custom_call.1} parent=1 // pred_check_branch
      %46 = sbr.rel (0) target = $region13
    $region12: #{tpu_custom_call.1} parent=1 // pred_region
      %s48 = ssub.s32 256, 256
      %49 = vsyncadd [#allocation6], %s48
      %s50 = sshll.u32 [#allocation7], 4
      %s51 = int_to_ptr.vmem [resolvable:$true] %s50
      %56 = dma.hbm_to_vmem [thread:$0]  %s2, 256, %s51, [#allocation6], 128, 128, 8
    $region13: #{tpu_custom_call.1} parent=1 // pred_fallthru
      _
    // Predicated region
    $region14: #{tpu_custom_call.1} parent=1 // pred_check
      _
    $region15: #{tpu_custom_call.1} parent=1 // pred_check_branch
      %58 = sbr.rel (0) target = $region17
    $region16: #{tpu_custom_call.1} parent=1 // pred_region
      _
    $region17: #{tpu_custom_call.1} parent=1 // pred_fallthru
      _
    // Predicated region
    $region18: #{tpu_custom_call.1} parent=1 // pred_check
      _
    $region19: #{tpu_custom_call.1} parent=1 // pred_check_branch
      %60 = sbr.rel (0) target = $region21
    $region20: #{tpu_custom_call.1} parent=1 // pred_region
      %s62 = ssub.s32 384, 384
      %63 = vsyncadd [#allocation9], %s62
      %s64 = sshll.u32 [#allocation8], 4
      %s65 = int_to_ptr.vmem [resolvable:$true] %s64
      %70 = dma.hbm_to_vmem [thread:$0]  %s4, 384, %s65, [#allocation9], 128, 128, 8
    $region21: #{tpu_custom_call.1} parent=1 // pred_fallthru
      _
    // Predicated region
    $region22: #{tpu_custom_call.1} parent=1 // pred_check
      _
    $region23: #{tpu_custom_call.1} parent=1 // pred_check_branch
      %72 = sbr.rel (0) target = $region25
    $region24: #{tpu_custom_call.1} parent=1 // pred_region
      _
    $region25: #{tpu_custom_call.1} parent=1 // pred_fallthru
      _
    // Predicated region
    $region26: #{tpu_custom_call.1} parent=1 // pred_check
      _
    $region27: #{tpu_custom_call.1} parent=1 // pred_check_branch
      %74 = sbr.rel (0) target = $region29
    $region28: #{tpu_custom_call.1} parent=1 // pred_region
      %s76 = ssub.s32 384, 384
      %77 = vsyncadd [#allocation9], %s76
      %s78 = sshll.u32 [#allocation10], 4
      %s79 = int_to_ptr.vmem [resolvable:$true] %s78
      %84 = dma.hbm_to_vmem [thread:$0]  %s6, 384, %s79, [#allocation9], 128, 128, 8
    $region29: #{tpu_custom_call.1} parent=1 // pred_fallthru
      _
    // Predicated region
    $region30: #{tpu_custom_call.1} parent=1 // pred_check
      _
    $region31: #{tpu_custom_call.1} parent=1 // pred_check_branch
      %86 = sbr.rel (0) target = $region33
    $region32: #{tpu_custom_call.1} parent=1 // pred_region
      _
    $region33: #{tpu_custom_call.1} parent=1 // pred_fallthru
      _
    // Predicated region
    $region34: #{tpu_custom_call.1} parent=1 // pred_check
      _
    $region35: #{tpu_custom_call.1} parent=1 // pred_check_branch
      %88 = sbr.rel (0) target = $region37
    $region36: #{tpu_custom_call.1} parent=1 // pred_region
      %s90 = ssub.s32 512, 512
      %91 = vsyncadd [#allocation12], %s90
      %s92 = sshll.u32 [#allocation11], 4
      %s93 = int_to_ptr.vmem [resolvable:$true] %s92
      %98 = dma.hbm_to_vmem [thread:$0]  %s8, 512, %s93, [#allocation12], 128, 128, 8
    $region37: #{tpu_custom_call.1} parent=1 // pred_fallthru
      _
    // Predicated region
    $region38: #{tpu_custom_call.1} parent=1 // pred_check
      _
    $region39: #{tpu_custom_call.1} parent=1 // pred_check_branch
      %100 = sbr.rel (0) target = $region41
    $region40: #{tpu_custom_call.1} parent=1 // pred_region
      %s102 = ssub.s32 512, 512
      %103 = vsyncadd [#allocation12], %s102
      %s104 = sshll.u32 [#allocation13], 4
      %s105 = int_to_ptr.vmem [resolvable:$true] %s104
      %110 = dma.hbm_to_vmem [thread:$0]  %s9, 512, %s105, [#allocation12], 128, 128, 8
    $region41: #{tpu_custom_call.1} parent=1 // pred_fallthru
      _
    // Predicated region
    $region42: #{tpu_custom_call.1} parent=1 // pred_check
      _
    $region43: #{tpu_custom_call.1} parent=1 // pred_check_branch
      %112 = sbr.rel (0) target = $region45
    $region44: #{tpu_custom_call.1} parent=1 // pred_region
      _
    $region45: #{tpu_custom_call.1} parent=1 // pred_fallthru
      _
    // Predicated region
    $region46: #{tpu_custom_call.1} parent=1 // pred_check
      _
    $region47: #{tpu_custom_call.1} parent=1 // pred_check_branch
      %114 = sbr.rel (0) target = $region49
    $region48: #{tpu_custom_call.1} parent=1 // pred_region
      %115 = dma.done [#allocation3], 256
    $region49: #{tpu_custom_call.1} parent=1 // pred_fallthru
      _
    // Predicated region
    $region50: #{tpu_custom_call.1} parent=1 // pred_check
      _
    $region51: #{tpu_custom_call.1} parent=1 // pred_check_branch
      %117 = sbr.rel (0) target = $region53
    $region52: #{tpu_custom_call.1} parent=1 // pred_region
      %118 = dma.done [#allocation6], 512
    $region53: #{tpu_custom_call.1} parent=1 // pred_fallthru
      _
    // Predicated region
    $region54: #{tpu_custom_call.1} parent=1 // pred_check
      _
    $region55: #{tpu_custom_call.1} parent=1 // pred_check_branch
      %120 = sbr.rel (0) target = $region57
    $region56: #{tpu_custom_call.1} parent=1 // pred_region
      %121 = dma.done [#allocation6], 256
    $region57: #{tpu_custom_call.1} parent=1 // pred_fallthru
      _
    // Predicated region
    $region58: #{tpu_custom_call.1} parent=1 // pred_check
      _
    $region59: #{tpu_custom_call.1} parent=1 // pred_check_branch
      %123 = sbr.rel (0) target = $region61
    $region60: #{tpu_custom_call.1} parent=1 // pred_region
      %124 = dma.done [#allocation9], 384
    $region61: #{tpu_custom_call.1} parent=1 // pred_fallthru
      _
    // Predicated region
    $region62: #{tpu_custom_call.1} parent=1 // pred_check
      _
    $region63: #{tpu_custom_call.1} parent=1 // pred_check_branch
      %126 = sbr.rel (0) target = $region65
    $region64: #{tpu_custom_call.1} parent=1 // pred_region
      %127 = dma.done [#allocation9], 384
    $region65: #{tpu_custom_call.1} parent=1 // pred_fallthru
      _
    // Predicated region
    $region66: #{tpu_custom_call.1} parent=1 // pred_check
      _
    $region67: #{tpu_custom_call.1} parent=1 // pred_check_branch
      %129 = sbr.rel (0) target = $region69
    $region68: #{tpu_custom_call.1} parent=1 // pred_region
      %130 = dma.done [#allocation12], 512
    $region69: #{tpu_custom_call.1} parent=1 // pred_fallthru
      _
    // Predicated region
    $region70: #{tpu_custom_call.1} parent=1 // pred_check
      _
    $region71: #{tpu_custom_call.1} parent=1 // pred_check_branch
      %132 = sbr.rel (0) target = $region73
    $region72: #{tpu_custom_call.1} parent=1 // pred_region
      %133 = dma.done [#allocation12], 512
    $region73: #{tpu_custom_call.1} parent=1 // pred_fallthru
      _
    %v134 = vld [vmem:[#allocation2] sm:$0xff]
    %v135 = vld [vmem:[#allocation2 + $0x8] sm:$0xff]
    %v136 = vld [vmem:[#allocation5] sm:$0xff]
    %v137 = vld [vmem:[#allocation5 + $0x8] sm:$0xff]
    %v138 = vld [vmem:[#allocation5 + $0x10] sm:$0xff]
    %v139 = vld [vmem:[#allocation5 + $0x18] sm:$0xff]
    %v140 = vld [vmem:[#allocation7] sm:$0xff]
    %v141 = vld [vmem:[#allocation7 + $0x8] sm:$0xff]
    %v142 = vld [vmem:[%s3] sm:$0x1]
    %v144 = vlaneseq
    %v145 = vshrl.u32 %v144, 7
    %v146 = vsub.s32 0, %v145
    %v147 = vrot.slane %v142, %v146
    %vm149 = vcmask 130048
    %v151 = vsel %vm149, %v134, 0
    %v154 = vsel %vm149, %v135, 0
    %156 = vmatprep.subr.mxu0 0.0
    %157 = vmatpush1.msra.mxu0 0.0
    %158 = vmatprep.subr.mxu0 0.0
    %159 = vmatpush1.msra.mxu0 0.0
    %160 = vmatprep.subr.mxu0 0.0
    %161 = vmatpush1.msra.mxu0 0.0
    %162 = vmatprep.subr.mxu0 0.0
    %163 = vmatpush1.msra.mxu0 0.0
    %164 = vmatprep.subr.mxu0 0.0
    %165 = vmatpush1.msra.mxu0 0.0
    %166 = vmatprep.subr.mxu0 0.0
    %167 = vmatpush1.msra.mxu0 0.0
    %168 = vmatprep.subr.mxu0 0.0
    %169 = vmatpush1.msra.mxu0 0.0
    %170 = vmatprep.subr.mxu0 0.0
    %171 = vmatpush1.msra.mxu0 0.0
    %172 = vmatprep.subr.mxu0 0.0
    %173 = vmatpush1.msra.mxu0 0.0
    %174 = vmatprep.subr.mxu0 0.0
    %175 = vmatpush1.msra.mxu0 0.0
    %176 = vmatprep.subr.mxu0 0.0
    %177 = vmatpush1.msra.mxu0 0.0
    %178 = vmatprep.subr.mxu0 0.0
    %179 = vmatpush1.msra.mxu0 0.0
    %180 = vmatprep.subr.mxu0 0.0
    %181 = vmatpush1.msra.mxu0 0.0
    %182 = vmatprep.subr.mxu0 0.0
    %183 = vmatpush1.msra.mxu0 0.0
    %184 = vmatprep.subr.mxu0 0.0
    %185 = vmatpush1.msra.mxu0 %v141
    %186 = vmatprep.subr.mxu0 0.0
    %187 = vmatpush1.msra.mxu0 %v140
    %188 = vmatprep.subr.mxu0 0.0
    %189 = vmatpush2.msra.mxu0 0.0
    %190 = vmatprep.subr.mxu0 0.0
    %191 = vmatpush2.msra.mxu0 0.0
    %192 = vmatprep.subr.mxu0 0.0
    %193 = vmatpush2.msra.mxu0 0.0
    %194 = vmatprep.subr.mxu0 0.0
    %195 = vmatpush2.msra.mxu0 0.0
    %196 = vmatprep.subr.mxu0 0.0
    %197 = vmatpush2.msra.mxu0 0.0
    %198 = vmatprep.subr.mxu0 0.0
    %199 = vmatpush2.msra.mxu0 0.0
    %200 = vmatprep.subr.mxu0 0.0
    %201 = vmatpush2.msra.mxu0 0.0
    %202 = vmatprep.subr.mxu0 0.0
    %203 = vmatpush2.msra.mxu0 0.0
    %204 = vmatprep.subr.mxu0 0.0
    %205 = vmatpush2.msra.mxu0 0.0
    %206 = vmatprep.subr.mxu0 0.0
    %207 = vmatpush2.msra.mxu0 0.0
    %208 = vmatprep.subr.mxu0 0.0
    %209 = vmatpush2.msra.mxu0 0.0
    %210 = vmatprep.subr.mxu0 0.0
    %211 = vmatpush2.msra.mxu0 0.0
    %212 = vmatprep.subr.mxu0 0.0
    %213 = vmatpush2.msra.mxu0 0.0
    %214 = vmatprep.subr.mxu0 0.0
    %215 = vmatpush2.msra.mxu0 0.0
    %216 = vmatprep.subr.mxu0 0.0
    %217 = vmatpush2.msra.mxu0 0.0
    %218 = vmatprep.subr.mxu0 0.0
    %219 = vmatpush2.msra.mxu0 0.0
    %220 = vmatprep.mubr.f32.mxu0 0.0
    %221 = vmatmul.mubr.f32.gmra.mxu0 %v151
    %v222 = vpop.f32.mrf.mxu0
    %v223 = vadd.f32 %v147, %v222
    %v224 = vpop.f32.mrf.mxu0
    %225 = vmatprep.mubr.f32.mxu0 0.0
    %226 = vmatmul.mubr.f32.gmra.mxu0 %v154
    %v227 = vpop.f32.mrf.mxu0
    %v228 = vadd.f32 %v147, %v227
    %v229 = vpop.f32.mrf.mxu0
    %230 = vdwg.mxu0
    %v231 = vld [vmem:[#allocation8] sm:$0xff]
    %v232 = vld [vmem:[#allocation8 + $0x8] sm:$0xff]
    %v233 = vld [vmem:[#allocation8 + $0x10] sm:$0xff]
    %v234 = vld [vmem:[%s5] sm:$0x1]
    %v236 = vlaneseq
    %v237 = vshrl.u32 %v236, 7
    %v238 = vsub.s32 0, %v237
    %v239 = vrot.slane %v234, %v238
    %vm241 = vcmask 195584
    %v243 = vsel %vm241, %v136, 0
    %v246 = vsel %vm241, %v137, 0
    %v249 = vsel %vm241, %v138, 0
    %v252 = vsel %vm241, %v139, 0
    %254 = vmatprep.subr.mxu0 0.0
    %255 = vmatpush1.msra.mxu0 0.0
    %256 = vmatprep.subr.mxu0 0.0
    %257 = vmatpush1.msra.mxu0 0.0
    %258 = vmatprep.subr.mxu0 0.0
    %259 = vmatpush1.msra.mxu0 0.0
    %260 = vmatprep.subr.mxu0 0.0
    %261 = vmatpush1.msra.mxu0 0.0
    %262 = vmatprep.subr.mxu0 0.0
    %263 = vmatpush1.msra.mxu0 0.0
    %264 = vmatprep.subr.mxu0 0.0
    %265 = vmatpush1.msra.mxu0 0.0
    %266 = vmatprep.subr.mxu0 0.0
    %267 = vmatpush1.msra.mxu0 0.0
    %268 = vmatprep.subr.mxu0 0.0
    %269 = vmatpush1.msra.mxu0 0.0
    %270 = vmatprep.subr.mxu0 0.0
    %271 = vmatpush1.msra.mxu0 0.0
    %272 = vmatprep.subr.mxu0 0.0
    %273 = vmatpush1.msra.mxu0 0.0
    %274 = vmatprep.subr.mxu0 0.0
    %275 = vmatpush1.msra.mxu0 0.0
    %276 = vmatprep.subr.mxu0 0.0
    %277 = vmatpush1.msra.mxu0 0.0
    %278 = vmatprep.subr.mxu0 0.0
    %279 = vmatpush1.msra.mxu0 0.0
    %280 = vmatprep.subr.mxu0 0.0
    %281 = vmatpush1.msra.mxu0 %v233
    %282 = vmatprep.subr.mxu0 0.0
    %283 = vmatpush1.msra.mxu0 %v232
    %284 = vmatprep.subr.mxu0 0.0
    %285 = vmatpush1.msra.mxu0 %v231
    %286 = vmatprep.subr.mxu0 0.0
    %287 = vmatpush2.msra.mxu0 0.0
    %288 = vmatprep.subr.mxu0 0.0
    %289 = vmatpush2.msra.mxu0 0.0
    %290 = vmatprep.subr.mxu0 0.0
    %291 = vmatpush2.msra.mxu0 0.0
    %292 = vmatprep.subr.mxu0 0.0
    %293 = vmatpush2.msra.mxu0 0.0
    %294 = vmatprep.subr.mxu0 0.0
    %295 = vmatpush2.msra.mxu0 0.0
    %296 = vmatprep.subr.mxu0 0.0
    %297 = vmatpush2.msra.mxu0 0.0
    %298 = vmatprep.subr.mxu0 0.0
    %299 = vmatpush2.msra.mxu0 0.0
    %300 = vmatprep.subr.mxu0 0.0
    %301 = vmatpush2.msra.mxu0 0.0
    %302 = vmatprep.subr.mxu0 0.0
    %303 = vmatpush2.msra.mxu0 0.0
    %304 = vmatprep.subr.mxu0 0.0
    %305 = vmatpush2.msra.mxu0 0.0
    %306 = vmatprep.subr.mxu0 0.0
    %307 = vmatpush2.msra.mxu0 0.0
    %308 = vmatprep.subr.mxu0 0.0
    %309 = vmatpush2.msra.mxu0 0.0
    %310 = vmatprep.subr.mxu0 0.0
    %311 = vmatpush2.msra.mxu0 0.0
    %312 = vmatprep.subr.mxu0 0.0
    %313 = vmatpush2.msra.mxu0 0.0
    %314 = vmatprep.subr.mxu0 0.0
    %315 = vmatpush2.msra.mxu0 0.0
    %316 = vmatprep.subr.mxu0 0.0
    %317 = vmatpush2.msra.mxu0 0.0
    %318 = vmatprep.mubr.f32.mxu0 0.0
    %319 = vmatmul.mubr.f32.gmra.mxu0 %v243
    %v320 = vpop.f32.mrf.mxu0
    %v321 = vadd.f32 %v239, %v320
    %v322 = vpop.f32.mrf.mxu0
    %323 = vmatprep.mubr.f32.mxu0 0.0
    %324 = vmatmul.mubr.f32.gmra.mxu0 %v246
    %v325 = vpop.f32.mrf.mxu0
    %v326 = vadd.f32 %v239, %v325
    %v327 = vpop.f32.mrf.mxu0
    %328 = vmatprep.mubr.f32.mxu0 0.0
    %329 = vmatmul.mubr.f32.gmra.mxu0 %v249
    %v330 = vpop.f32.mrf.mxu0
    %v331 = vadd.f32 %v239, %v330
    %v332 = vpop.f32.mrf.mxu0
    %333 = vmatprep.mubr.f32.mxu0 0.0
    %334 = vmatmul.mubr.f32.gmra.mxu0 %v252
    %v335 = vpop.f32.mrf.mxu0
    %v336 = vadd.f32 %v239, %v335
    %v337 = vpop.f32.mrf.mxu0
    %338 = vdwg.mxu0
    %v339 = vld [vmem:[#allocation10] sm:$0xff]
    %v340 = vld [vmem:[#allocation10 + $0x8] sm:$0xff]
    %v341 = vld [vmem:[#allocation10 + $0x10] sm:$0xff]
    %v342 = vld [vmem:[%s7] sm:$0x1]
    %v344 = vlaneseq
    %v345 = vshrl.u32 %v344, 7
    %v346 = vsub.s32 0, %v345
    %v347 = vrot.slane %v342, %v346
    %349 = vmatprep.subr.mxu0 0.0
    %350 = vmatpush1.msra.mxu0 0.0
    %351 = vmatprep.subr.mxu0 0.0
    %352 = vmatpush1.msra.mxu0 0.0
    %353 = vmatprep.subr.mxu0 0.0
    %354 = vmatpush1.msra.mxu0 0.0
    %355 = vmatprep.subr.mxu0 0.0
    %356 = vmatpush1.msra.mxu0 0.0
    %357 = vmatprep.subr.mxu0 0.0
    %358 = vmatpush1.msra.mxu0 0.0
    %359 = vmatprep.subr.mxu0 0.0
    %360 = vmatpush1.msra.mxu0 0.0
    %361 = vmatprep.subr.mxu0 0.0
    %362 = vmatpush1.msra.mxu0 0.0
    %363 = vmatprep.subr.mxu0 0.0
    %364 = vmatpush1.msra.mxu0 0.0
    %365 = vmatprep.subr.mxu0 0.0
    %366 = vmatpush1.msra.mxu0 0.0
    %367 = vmatprep.subr.mxu0 0.0
    %368 = vmatpush1.msra.mxu0 0.0
    %369 = vmatprep.subr.mxu0 0.0
    %370 = vmatpush1.msra.mxu0 0.0
    %371 = vmatprep.subr.mxu0 0.0
    %372 = vmatpush1.msra.mxu0 0.0
    %373 = vmatprep.subr.mxu0 0.0
    %374 = vmatpush1.msra.mxu0 0.0
    %375 = vmatprep.subr.mxu0 0.0
    %376 = vmatpush1.msra.mxu0 %v341
    %377 = vmatprep.subr.mxu0 0.0
    %378 = vmatpush1.msra.mxu0 %v340
    %379 = vmatprep.subr.mxu0 0.0
    %380 = vmatpush1.msra.mxu0 %v339
    %381 = vmatprep.subr.mxu0 0.0
    %382 = vmatpush2.msra.mxu0 0.0
    %383 = vmatprep.subr.mxu0 0.0
    %384 = vmatpush2.msra.mxu0 0.0
    %385 = vmatprep.subr.mxu0 0.0
    %386 = vmatpush2.msra.mxu0 0.0
    %387 = vmatprep.subr.mxu0 0.0
    %388 = vmatpush2.msra.mxu0 0.0
    %389 = vmatprep.subr.mxu0 0.0
    %390 = vmatpush2.msra.mxu0 0.0
    %391 = vmatprep.subr.mxu0 0.0
    %392 = vmatpush2.msra.mxu0 0.0
    %393 = vmatprep.subr.mxu0 0.0
    %394 = vmatpush2.msra.mxu0 0.0
    %395 = vmatprep.subr.mxu0 0.0
    %396 = vmatpush2.msra.mxu0 0.0
    %397 = vmatprep.subr.mxu0 0.0
    %398 = vmatpush2.msra.mxu0 0.0
    %399 = vmatprep.subr.mxu0 0.0
    %400 = vmatpush2.msra.mxu0 0.0
    %401 = vmatprep.subr.mxu0 0.0
    %402 = vmatpush2.msra.mxu0 0.0
    %403 = vmatprep.subr.mxu0 0.0
    %404 = vmatpush2.msra.mxu0 0.0
    %405 = vmatprep.subr.mxu0 0.0
    %406 = vmatpush2.msra.mxu0 0.0
    %407 = vmatprep.subr.mxu0 0.0
    %408 = vmatpush2.msra.mxu0 0.0
    %409 = vmatprep.subr.mxu0 0.0
    %410 = vmatpush2.msra.mxu0 0.0
    %411 = vmatprep.subr.mxu0 0.0
    %412 = vmatpush2.msra.mxu0 0.0
    %413 = vmatprep.mubr.f32.mxu0 0.0
    %414 = vmatmul.mubr.f32.gmra.mxu0 %v243
    %v415 = vpop.f32.mrf.mxu0
    %v416 = vadd.f32 %v347, %v415
    %v417 = vpop.f32.mrf.mxu0
    %418 = vmatprep.mubr.f32.mxu0 0.0
    %419 = vmatmul.mubr.f32.gmra.mxu0 %v246
    %v420 = vpop.f32.mrf.mxu0
    %v421 = vadd.f32 %v347, %v420
    %v422 = vpop.f32.mrf.mxu0
    %423 = vmatprep.mubr.f32.mxu0 0.0
    %424 = vmatmul.mubr.f32.gmra.mxu0 %v249
    %v425 = vpop.f32.mrf.mxu0
    %v426 = vadd.f32 %v347, %v425
    %v427 = vpop.f32.mrf.mxu0
    %428 = vmatprep.mubr.f32.mxu0 0.0
    %429 = vmatmul.mubr.f32.gmra.mxu0 %v252
    %v430 = vpop.f32.mrf.mxu0
    %v431 = vadd.f32 %v347, %v430
    %v432 = vpop.f32.mrf.mxu0
    %433 = vdwg.mxu0
    %v434 = vld [vmem:[#allocation11] sm:$0xff]
    %v435 = vld [vmem:[#allocation11 + $0x8] sm:$0xff]
    %v436 = vld [vmem:[#allocation11 + $0x10] sm:$0xff]
    %v437 = vld [vmem:[#allocation11 + $0x18] sm:$0xff]
    %v438 = vld [vmem:[%s10] sm:$0x1]
    %v440 = vlaneseq
    %v441 = vshrl.u32 %v440, 7
    %v442 = vsub.s32 0, %v441
    %v443 = vrot.slane %v438, %v442
    %vm445 = vcmask 261120
    %v447 = vsel %vm445, %v223, 0
    %v450 = vsel %vm445, %v228, 0
    %452 = vmatprep.subr.mxu0 0.0
    %453 = vmatpush1.msra.mxu0 0.0
    %454 = vmatprep.subr.mxu0 0.0
    %455 = vmatpush1.msra.mxu0 0.0
    %456 = vmatprep.subr.mxu0 0.0
    %457 = vmatpush1.msra.mxu0 0.0
    %458 = vmatprep.subr.mxu0 0.0
    %459 = vmatpush1.msra.mxu0 0.0
    %460 = vmatprep.subr.mxu0 0.0
    %461 = vmatpush1.msra.mxu0 0.0
    %462 = vmatprep.subr.mxu0 0.0
    %463 = vmatpush1.msra.mxu0 0.0
    %464 = vmatprep.subr.mxu0 0.0
    %465 = vmatpush1.msra.mxu0 0.0
    %466 = vmatprep.subr.mxu0 0.0
    %467 = vmatpush1.msra.mxu0 0.0
    %468 = vmatprep.subr.mxu0 0.0
    %469 = vmatpush1.msra.mxu0 0.0
    %470 = vmatprep.subr.mxu0 0.0
    %471 = vmatpush1.msra.mxu0 0.0
    %472 = vmatprep.subr.mxu0 0.0
    %473 = vmatpush1.msra.mxu0 0.0
    %474 = vmatprep.subr.mxu0 0.0
    %475 = vmatpush1.msra.mxu0 0.0
    %476 = vmatprep.subr.mxu0 0.0
    %477 = vmatpush1.msra.mxu0 %v437
    %478 = vmatprep.subr.mxu0 0.0
    %479 = vmatpush1.msra.mxu0 %v436
    %480 = vmatprep.subr.mxu0 0.0
    %481 = vmatpush1.msra.mxu0 %v435
    %482 = vmatprep.subr.mxu0 0.0
    %483 = vmatpush1.msra.mxu0 %v434
    %484 = vmatprep.subr.mxu0 0.0
    %485 = vmatpush2.msra.mxu0 0.0
    %486 = vmatprep.subr.mxu0 0.0
    %487 = vmatpush2.msra.mxu0 0.0
    %488 = vmatprep.subr.mxu0 0.0
    %489 = vmatpush2.msra.mxu0 0.0
    %490 = vmatprep.subr.mxu0 0.0
    %491 = vmatpush2.msra.mxu0 0.0
    %492 = vmatprep.subr.mxu0 0.0
    %493 = vmatpush2.msra.mxu0 0.0
    %494 = vmatprep.subr.mxu0 0.0
    %495 = vmatpush2.msra.mxu0 0.0
    %496 = vmatprep.subr.mxu0 0.0
    %497 = vmatpush2.msra.mxu0 0.0
    %498 = vmatprep.subr.mxu0 0.0
    %499 = vmatpush2.msra.mxu0 0.0
    %500 = vmatprep.subr.mxu0 0.0
    %501 = vmatpush2.msra.mxu0 0.0
    %502 = vmatprep.subr.mxu0 0.0
    %503 = vmatpush2.msra.mxu0 0.0
    %504 = vmatprep.subr.mxu0 0.0
    %505 = vmatpush2.msra.mxu0 0.0
    %506 = vmatprep.subr.mxu0 0.0
    %507 = vmatpush2.msra.mxu0 0.0
    %508 = vmatprep.subr.mxu0 0.0
    %509 = vmatpush2.msra.mxu0 0.0
    %510 = vmatprep.subr.mxu0 0.0
    %511 = vmatpush2.msra.mxu0 0.0
    %512 = vmatprep.subr.mxu0 0.0
    %513 = vmatpush2.msra.mxu0 0.0
    %514 = vmatprep.subr.mxu0 0.0
    %515 = vmatpush2.msra.mxu0 0.0
    %516 = vmatprep.mubr.f32.mxu0 0.0
    %517 = vmatmul.mubr.f32.gmra.mxu0 %v447
    %v518 = vpop.f32.mrf.mxu0
    %v519 = vadd.f32 %v443, %v518
    %v520 = vpop.f32.mrf.mxu0
    %521 = vmatprep.mubr.f32.mxu0 0.0
    %522 = vmatmul.mubr.f32.gmra.mxu0 %v450
    %v523 = vpop.f32.mrf.mxu0
    %v524 = vadd.f32 %v443, %v523
    %v525 = vpop.f32.mrf.mxu0
    %526 = vdwg.mxu0
    %v527 = vld [vmem:[#allocation13] sm:$0xff]
    %v528 = vld [vmem:[#allocation13 + $0x8] sm:$0xff]
    %v529 = vld [vmem:[#allocation13 + $0x10] sm:$0xff]
    %v530 = vld [vmem:[#allocation13 + $0x18] sm:$0xff]
    %vm531 = vcmask 64512
    %v532 = vsel %vm531, %v223, 0
    %v535 = vsel %vm531, %v321, 0
    %v538 = vsel %vm531, %v326, 0
    %540 = vmatprep.subr.mxu0 0.0
    %541 = vmatpush1.xpose.msra.mxu0 0.0
    %542 = vmatprep.subr.mxu0 0.0
    %543 = vmatpush1.xpose.msra.mxu0 0.0
    %544 = vmatprep.subr.mxu0 0.0
    %545 = vmatpush1.xpose.msra.mxu0 0.0
    %546 = vmatprep.subr.mxu0 0.0
    %547 = vmatpush1.xpose.msra.mxu0 0.0
    %548 = vmatprep.subr.mxu0 0.0
    %549 = vmatpush1.xpose.msra.mxu0 0.0
    %550 = vmatprep.subr.mxu0 0.0
    %551 = vmatpush1.xpose.msra.mxu0 0.0
    %552 = vmatprep.subr.mxu0 0.0
    %553 = vmatpush1.xpose.msra.mxu0 0.0
    %554 = vmatprep.subr.mxu0 0.0
    %555 = vmatpush1.xpose.msra.mxu0 0.0
    %556 = vmatprep.subr.mxu0 0.0
    %557 = vmatpush1.xpose.msra.mxu0 0.0
    %558 = vmatprep.subr.mxu0 0.0
    %559 = vmatpush1.xpose.msra.mxu0 0.0
    %560 = vmatprep.subr.mxu0 0.0
    %561 = vmatpush1.xpose.msra.mxu0 0.0
    %562 = vmatprep.subr.mxu0 0.0
    %563 = vmatpush1.xpose.msra.mxu0 0.0
    %564 = vmatprep.subr.mxu0 0.0
    %565 = vmatpush1.xpose.msra.mxu0 0.0
    %566 = vmatprep.subr.mxu0 0.0
    %567 = vmatpush1.xpose.msra.mxu0 0.0
    %568 = vmatprep.subr.mxu0 0.0
    %569 = vmatpush1.xpose.msra.mxu0 %v538
    %570 = vmatprep.subr.mxu0 0.0
    %571 = vmatpush1.xpose.msra.mxu0 %v535
    %572 = vmatprep.subr.mxu0 0.0
    %573 = vmatpush2.xpose.msra.mxu0 0.0
    %574 = vmatprep.subr.mxu0 0.0
    %575 = vmatpush2.xpose.msra.mxu0 0.0
    %576 = vmatprep.subr.mxu0 0.0
    %577 = vmatpush2.xpose.msra.mxu0 0.0
    %578 = vmatprep.subr.mxu0 0.0
    %579 = vmatpush2.xpose.msra.mxu0 0.0
    %580 = vmatprep.subr.mxu0 0.0
    %581 = vmatpush2.xpose.msra.mxu0 0.0
    %582 = vmatprep.subr.mxu0 0.0
    %583 = vmatpush2.xpose.msra.mxu0 0.0
    %584 = vmatprep.subr.mxu0 0.0
    %585 = vmatpush2.xpose.msra.mxu0 0.0
    %586 = vmatprep.subr.mxu0 0.0
    %587 = vmatpush2.xpose.msra.mxu0 0.0
    %588 = vmatprep.subr.mxu0 0.0
    %589 = vmatpush2.xpose.msra.mxu0 0.0
    %590 = vmatprep.subr.mxu0 0.0
    %591 = vmatpush2.xpose.msra.mxu0 0.0
    %592 = vmatprep.subr.mxu0 0.0
    %593 = vmatpush2.xpose.msra.mxu0 0.0
    %594 = vmatprep.subr.mxu0 0.0
    %595 = vmatpush2.xpose.msra.mxu0 0.0
    %596 = vmatprep.subr.mxu0 0.0
    %597 = vmatpush2.xpose.msra.mxu0 0.0
    %598 = vmatprep.subr.mxu0 0.0
    %599 = vmatpush2.xpose.msra.mxu0 0.0
    %600 = vmatprep.subr.mxu0 0.0
    %601 = vmatpush2.xpose.msra.mxu0 0.0
    %602 = vmatprep.subr.mxu0 0.0
    %603 = vmatpush2.xpose.msra.mxu0 0.0
    %604 = vmatprep.mubr.f32.mxu0 0.0
    %605 = vmatmul.mubr.f32.gmra.mxu0 %v532
    %v606 = vpop.f32.mrf.mxu0
    %v607 = vadd.f32 0.0, %v606
    %v608 = vpop.f32.mrf.mxu0
    %609 = vdwg.mxu0
    %v610 = vsel %vm531, %v228, 0
    %v613 = vsel %vm531, %v331, 0
    %v616 = vsel %vm531, %v336, 0
    %618 = vmatprep.subr.mxu0 0.0
    %619 = vmatpush1.xpose.msra.mxu0 0.0
    %620 = vmatprep.subr.mxu0 0.0
    %621 = vmatpush1.xpose.msra.mxu0 0.0
    %622 = vmatprep.subr.mxu0 0.0
    %623 = vmatpush1.xpose.msra.mxu0 0.0
    %624 = vmatprep.subr.mxu0 0.0
    %625 = vmatpush1.xpose.msra.mxu0 0.0
    %626 = vmatprep.subr.mxu0 0.0
    %627 = vmatpush1.xpose.msra.mxu0 0.0
    %628 = vmatprep.subr.mxu0 0.0
    %629 = vmatpush1.xpose.msra.mxu0 0.0
    %630 = vmatprep.subr.mxu0 0.0
    %631 = vmatpush1.xpose.msra.mxu0 0.0
    %632 = vmatprep.subr.mxu0 0.0
    %633 = vmatpush1.xpose.msra.mxu0 0.0
    %634 = vmatprep.subr.mxu0 0.0
    %635 = vmatpush1.xpose.msra.mxu0 0.0
    %636 = vmatprep.subr.mxu0 0.0
    %637 = vmatpush1.xpose.msra.mxu0 0.0
    %638 = vmatprep.subr.mxu0 0.0
    %639 = vmatpush1.xpose.msra.mxu0 0.0
    %640 = vmatprep.subr.mxu0 0.0
    %641 = vmatpush1.xpose.msra.mxu0 0.0
    %642 = vmatprep.subr.mxu0 0.0
    %643 = vmatpush1.xpose.msra.mxu0 0.0
    %644 = vmatprep.subr.mxu0 0.0
    %645 = vmatpush1.xpose.msra.mxu0 0.0
    %646 = vmatprep.subr.mxu0 0.0
    %647 = vmatpush1.xpose.msra.mxu0 %v616
    %648 = vmatprep.subr.mxu0 0.0
    %649 = vmatpush1.xpose.msra.mxu0 %v613
    %650 = vmatprep.subr.mxu0 0.0
    %651 = vmatpush2.xpose.msra.mxu0 0.0
    %652 = vmatprep.subr.mxu0 0.0
    %653 = vmatpush2.xpose.msra.mxu0 0.0
    %654 = vmatprep.subr.mxu0 0.0
    %655 = vmatpush2.xpose.msra.mxu0 0.0
    %656 = vmatprep.subr.mxu0 0.0
    %657 = vmatpush2.xpose.msra.mxu0 0.0
    %658 = vmatprep.subr.mxu0 0.0
    %659 = vmatpush2.xpose.msra.mxu0 0.0
    %660 = vmatprep.subr.mxu0 0.0
    %661 = vmatpush2.xpose.msra.mxu0 0.0
    %662 = vmatprep.subr.mxu0 0.0
    %663 = vmatpush2.xpose.msra.mxu0 0.0
    %664 = vmatprep.subr.mxu0 0.0
    %665 = vmatpush2.xpose.msra.mxu0 0.0
    %666 = vmatprep.subr.mxu0 0.0
    %667 = vmatpush2.xpose.msra.mxu0 0.0
    %668 = vmatprep.subr.mxu0 0.0
    %669 = vmatpush2.xpose.msra.mxu0 0.0
    %670 = vmatprep.subr.mxu0 0.0
    %671 = vmatpush2.xpose.msra.mxu0 0.0
    %672 = vmatprep.subr.mxu0 0.0
    %673 = vmatpush2.xpose.msra.mxu0 0.0
    %674 = vmatprep.subr.mxu0 0.0
    %675 = vmatpush2.xpose.msra.mxu0 0.0
    %676 = vmatprep.subr.mxu0 0.0
    %677 = vmatpush2.xpose.msra.mxu0 0.0
    %678 = vmatprep.subr.mxu0 0.0
    %679 = vmatpush2.xpose.msra.mxu0 0.0
    %680 = vmatprep.subr.mxu0 0.0
    %681 = vmatpush2.xpose.msra.mxu0 0.0
    %682 = vmatprep.mubr.f32.mxu0 0.0
    %683 = vmatmul.mubr.f32.gmra.mxu0 %v610
    %v684 = vpop.f32.mrf.mxu0
    %v685 = vadd.f32 0.0, %v684
    %v686 = vpop.f32.mrf.mxu0
    %687 = vdwg.mxu0
    %v688 = vmul.f32 %v607, 0.35355338
    %v689 = vmul.f32 %v685, 0.35355338
    %v690 = vsel %vm149, %v688, -inf
    %691 = vmax.xlane.f32.xlu0 %v690
    %v692 = vpop.xlane.xlu0 %691
    %v693 = vsel %vm149, %v689, -inf
    %694 = vmax.xlane.f32.xlu0 %v693
    %v695 = vpop.xlane.xlu0 %694
    %v696 = vsub.f32 %v688, %v692
    %v697 = vsub.f32 %v689, %v695
    %v698 = vmul.f32 %v696, 1.442695
    %v699 = vpow.pop %v698
    %v700 = vmul.f32 %v697, 1.442695
    %v701 = vpow.pop %v700
    %v702 = vsel %vm149, %v699, 0.0
    %703 = vadd.xlane.f32.xlu0 %v702
    %v704 = vpop.xlane.xlu0 %703
    %v705 = vsel %vm149, %v701, 0.0
    %706 = vadd.xlane.f32.xlu0 %v705
    %v707 = vpop.xlane.xlu0 %706
    %v708 = vrcp.pop %v704
    %v709 = vmul.f32 %v699, %v708
    %v710 = vrcp.pop %v707
    %v711 = vmul.f32 %v701, %v710
    %v713 = vsel %vm149, %v709, 0
    %715 = vmatprep.subr.mxu0 0.0
    %716 = vmatpush1.msra.mxu0 0.0
    %717 = vmatprep.subr.mxu0 0.0
    %718 = vmatpush1.msra.mxu0 0.0
    %719 = vmatprep.subr.mxu0 0.0
    %720 = vmatpush1.msra.mxu0 0.0
    %721 = vmatprep.subr.mxu0 0.0
    %722 = vmatpush1.msra.mxu0 0.0
    %723 = vmatprep.subr.mxu0 0.0
    %724 = vmatpush1.msra.mxu0 0.0
    %725 = vmatprep.subr.mxu0 0.0
    %726 = vmatpush1.msra.mxu0 0.0
    %727 = vmatprep.subr.mxu0 0.0
    %728 = vmatpush1.msra.mxu0 0.0
    %729 = vmatprep.subr.mxu0 0.0
    %730 = vmatpush1.msra.mxu0 0.0
    %731 = vmatprep.subr.mxu0 0.0
    %732 = vmatpush1.msra.mxu0 0.0
    %733 = vmatprep.subr.mxu0 0.0
    %734 = vmatpush1.msra.mxu0 0.0
    %735 = vmatprep.subr.mxu0 0.0
    %736 = vmatpush1.msra.mxu0 0.0
    %737 = vmatprep.subr.mxu0 0.0
    %738 = vmatpush1.msra.mxu0 0.0
    %739 = vmatprep.subr.mxu0 0.0
    %740 = vmatpush1.msra.mxu0 0.0
    %741 = vmatprep.subr.mxu0 0.0
    %742 = vmatpush1.msra.mxu0 0.0
    %743 = vmatprep.subr.mxu0 0.0
    %744 = vmatpush1.msra.mxu0 %v421
    %745 = vmatprep.subr.mxu0 0.0
    %746 = vmatpush1.msra.mxu0 %v416
    %747 = vmatprep.subr.mxu0 0.0
    %748 = vmatpush2.msra.mxu0 0.0
    %749 = vmatprep.subr.mxu0 0.0
    %750 = vmatpush2.msra.mxu0 0.0
    %751 = vmatprep.subr.mxu0 0.0
    %752 = vmatpush2.msra.mxu0 0.0
    %753 = vmatprep.subr.mxu0 0.0
    %754 = vmatpush2.msra.mxu0 0.0
    %755 = vmatprep.subr.mxu0 0.0
    %756 = vmatpush2.msra.mxu0 0.0
    %757 = vmatprep.subr.mxu0 0.0
    %758 = vmatpush2.msra.mxu0 0.0
    %759 = vmatprep.subr.mxu0 0.0
    %760 = vmatpush2.msra.mxu0 0.0
    %761 = vmatprep.subr.mxu0 0.0
    %762 = vmatpush2.msra.mxu0 0.0
    %763 = vmatprep.subr.mxu0 0.0
    %764 = vmatpush2.msra.mxu0 0.0
    %765 = vmatprep.subr.mxu0 0.0
    %766 = vmatpush2.msra.mxu0 0.0
    %767 = vmatprep.subr.mxu0 0.0
    %768 = vmatpush2.msra.mxu0 0.0
    %769 = vmatprep.subr.mxu0 0.0
    %770 = vmatpush2.msra.mxu0 0.0
    %771 = vmatprep.subr.mxu0 0.0
    %772 = vmatpush2.msra.mxu0 0.0
    %773 = vmatprep.subr.mxu0 0.0
    %774 = vmatpush2.msra.mxu0 0.0
    %775 = vmatprep.subr.mxu0 0.0
    %776 = vmatpush2.msra.mxu0 0.0
    %777 = vmatprep.subr.mxu0 0.0
    %778 = vmatpush2.msra.mxu0 0.0
    %779 = vmatprep.mubr.f32.mxu0 0.0
    %780 = vmatmul.mubr.f32.gmra.mxu0 %v713
    %v781 = vpop.f32.mrf.mxu0
    %v782 = vadd.f32 0.0, %v781
    %v783 = vpop.f32.mrf.mxu0
    %784 = vdwg.mxu0
    %v786 = vsel %vm149, %v711, 0
    %788 = vmatprep.subr.mxu0 0.0
    %789 = vmatpush1.msra.mxu0 0.0
    %790 = vmatprep.subr.mxu0 0.0
    %791 = vmatpush1.msra.mxu0 0.0
    %792 = vmatprep.subr.mxu0 0.0
    %793 = vmatpush1.msra.mxu0 0.0
    %794 = vmatprep.subr.mxu0 0.0
    %795 = vmatpush1.msra.mxu0 0.0
    %796 = vmatprep.subr.mxu0 0.0
    %797 = vmatpush1.msra.mxu0 0.0
    %798 = vmatprep.subr.mxu0 0.0
    %799 = vmatpush1.msra.mxu0 0.0
    %800 = vmatprep.subr.mxu0 0.0
    %801 = vmatpush1.msra.mxu0 0.0
    %802 = vmatprep.subr.mxu0 0.0
    %803 = vmatpush1.msra.mxu0 0.0
    %804 = vmatprep.subr.mxu0 0.0
    %805 = vmatpush1.msra.mxu0 0.0
    %806 = vmatprep.subr.mxu0 0.0
    %807 = vmatpush1.msra.mxu0 0.0
    %808 = vmatprep.subr.mxu0 0.0
    %809 = vmatpush1.msra.mxu0 0.0
    %810 = vmatprep.subr.mxu0 0.0
    %811 = vmatpush1.msra.mxu0 0.0
    %812 = vmatprep.subr.mxu0 0.0
    %813 = vmatpush1.msra.mxu0 0.0
    %814 = vmatprep.subr.mxu0 0.0
    %815 = vmatpush1.msra.mxu0 0.0
    %816 = vmatprep.subr.mxu0 0.0
    %817 = vmatpush1.msra.mxu0 %v431
    %818 = vmatprep.subr.mxu0 0.0
    %819 = vmatpush1.msra.mxu0 %v426
    %820 = vmatprep.subr.mxu0 0.0
    %821 = vmatpush2.msra.mxu0 0.0
    %822 = vmatprep.subr.mxu0 0.0
    %823 = vmatpush2.msra.mxu0 0.0
    %824 = vmatprep.subr.mxu0 0.0
    %825 = vmatpush2.msra.mxu0 0.0
    %826 = vmatprep.subr.mxu0 0.0
    %827 = vmatpush2.msra.mxu0 0.0
    %828 = vmatprep.subr.mxu0 0.0
    %829 = vmatpush2.msra.mxu0 0.0
    %830 = vmatprep.subr.mxu0 0.0
    %831 = vmatpush2.msra.mxu0 0.0
    %832 = vmatprep.subr.mxu0 0.0
    %833 = vmatpush2.msra.mxu0 0.0
    %834 = vmatprep.subr.mxu0 0.0
    %835 = vmatpush2.msra.mxu0 0.0
    %836 = vmatprep.subr.mxu0 0.0
    %837 = vmatpush2.msra.mxu0 0.0
    %838 = vmatprep.subr.mxu0 0.0
    %839 = vmatpush2.msra.mxu0 0.0
    %840 = vmatprep.subr.mxu0 0.0
    %841 = vmatpush2.msra.mxu0 0.0
    %842 = vmatprep.subr.mxu0 0.0
    %843 = vmatpush2.msra.mxu0 0.0
    %844 = vmatprep.subr.mxu0 0.0
    %845 = vmatpush2.msra.mxu0 0.0
    %846 = vmatprep.subr.mxu0 0.0
    %847 = vmatpush2.msra.mxu0 0.0
    %848 = vmatprep.subr.mxu0 0.0
    %849 = vmatpush2.msra.mxu0 0.0
    %850 = vmatprep.subr.mxu0 0.0
    %851 = vmatpush2.msra.mxu0 0.0
    %852 = vmatprep.mubr.f32.mxu0 0.0
    %853 = vmatmul.mubr.f32.gmra.mxu0 %v786
    %v854 = vpop.f32.mrf.mxu0
    %v855 = vadd.f32 0.0, %v854
    %v856 = vpop.f32.mrf.mxu0
    %857 = vdwg.mxu0
    %v859 = vsel %vm531, %v782, 0
    %v862 = vsel %vm531, %v855, 0
    %864 = vmatprep.subr.mxu0 0.0
    %865 = vmatpush1.msra.mxu0 0.0
    %866 = vmatprep.subr.mxu0 0.0
    %867 = vmatpush1.msra.mxu0 0.0
    %868 = vmatprep.subr.mxu0 0.0
    %869 = vmatpush1.msra.mxu0 0.0
    %870 = vmatprep.subr.mxu0 0.0
    %871 = vmatpush1.msra.mxu0 0.0
    %872 = vmatprep.subr.mxu0 0.0
    %873 = vmatpush1.msra.mxu0 0.0
    %874 = vmatprep.subr.mxu0 0.0
    %875 = vmatpush1.msra.mxu0 0.0
    %876 = vmatprep.subr.mxu0 0.0
    %877 = vmatpush1.msra.mxu0 0.0
    %878 = vmatprep.subr.mxu0 0.0
    %879 = vmatpush1.msra.mxu0 0.0
    %880 = vmatprep.subr.mxu0 0.0
    %881 = vmatpush1.msra.mxu0 0.0
    %882 = vmatprep.subr.mxu0 0.0
    %883 = vmatpush1.msra.mxu0 0.0
    %884 = vmatprep.subr.mxu0 0.0
    %885 = vmatpush1.msra.mxu0 0.0
    %886 = vmatprep.subr.mxu0 0.0
    %887 = vmatpush1.msra.mxu0 0.0
    %888 = vmatprep.subr.mxu0 0.0
    %889 = vmatpush1.msra.mxu0 0.0
    %890 = vmatprep.subr.mxu0 0.0
    %891 = vmatpush1.msra.mxu0 0.0
    %892 = vmatprep.subr.mxu0 0.0
    %893 = vmatpush1.msra.mxu0 0.0
    %894 = vmatprep.subr.mxu0 0.0
    %895 = vmatpush1.msra.mxu0 %v527
    %896 = vmatprep.subr.mxu0 0.0
    %897 = vmatpush2.msra.mxu0 0.0
    %898 = vmatprep.subr.mxu0 0.0
    %899 = vmatpush2.msra.mxu0 0.0
    %900 = vmatprep.subr.mxu0 0.0
    %901 = vmatpush2.msra.mxu0 0.0
    %902 = vmatprep.subr.mxu0 0.0
    %903 = vmatpush2.msra.mxu0 0.0
    %904 = vmatprep.subr.mxu0 0.0
    %905 = vmatpush2.msra.mxu0 0.0
    %906 = vmatprep.subr.mxu0 0.0
    %907 = vmatpush2.msra.mxu0 0.0
    %908 = vmatprep.subr.mxu0 0.0
    %909 = vmatpush2.msra.mxu0 0.0
    %910 = vmatprep.subr.mxu0 0.0
    %911 = vmatpush2.msra.mxu0 0.0
    %912 = vmatprep.subr.mxu0 0.0
    %913 = vmatpush2.msra.mxu0 0.0
    %914 = vmatprep.subr.mxu0 0.0
    %915 = vmatpush2.msra.mxu0 0.0
    %916 = vmatprep.subr.mxu0 0.0
    %917 = vmatpush2.msra.mxu0 0.0
    %918 = vmatprep.subr.mxu0 0.0
    %919 = vmatpush2.msra.mxu0 0.0
    %920 = vmatprep.subr.mxu0 0.0
    %921 = vmatpush2.msra.mxu0 0.0
    %922 = vmatprep.subr.mxu0 0.0
    %923 = vmatpush2.msra.mxu0 0.0
    %924 = vmatprep.subr.mxu0 0.0
    %925 = vmatpush2.msra.mxu0 0.0
    %926 = vmatprep.subr.mxu0 0.0
    %927 = vmatpush2.msra.mxu0 0.0
    %928 = vmatprep.mubr.f32.mxu0 0.0
    %929 = vmatmul.mubr.f32.gmra.mxu0 %v859
    %v930 = vpop.f32.mrf.mxu0
    %v931 = vadd.f32 0.0, %v930
    %v932 = vpop.f32.mrf.mxu0
    %933 = vmatprep.mubr.f32.mxu0 0.0
    %934 = vmatmul.mubr.f32.gmra.mxu0 %v862
    %v935 = vpop.f32.mrf.mxu0
    %v936 = vadd.f32 0.0, %v935
    %v937 = vpop.f32.mrf.mxu0
    %938 = vdwg.mxu0
    %v939 = vadd.f32 %v519, %v931
    %v940 = vadd.f32 %v524, %v936
    %941 = vrot.lane.b32.xlu0 %v223, 120
    %v942 = vpop.permute.xlu0 %941
    %943 = vrot.lane.b32.xlu0 %v321, 120
    %v944 = vpop.permute.xlu0 %943
    %945 = vrot.lane.b32.xlu0 %v326, 120
    %v946 = vpop.permute.xlu0 %945
    %v947 = vsel %vm531, %v942, 0
    %v949 = vsel %vm531, %v944, 0
    %v951 = vsel %vm531, %v946, 0
    %953 = vmatprep.subr.mxu0 0.0
    %954 = vmatpush1.xpose.msra.mxu0 0.0
    %955 = vmatprep.subr.mxu0 0.0
    %956 = vmatpush1.xpose.msra.mxu0 0.0
    %957 = vmatprep.subr.mxu0 0.0
    %958 = vmatpush1.xpose.msra.mxu0 0.0
    %959 = vmatprep.subr.mxu0 0.0
    %960 = vmatpush1.xpose.msra.mxu0 0.0
    %961 = vmatprep.subr.mxu0 0.0
    %962 = vmatpush1.xpose.msra.mxu0 0.0
    %963 = vmatprep.subr.mxu0 0.0
    %964 = vmatpush1.xpose.msra.mxu0 0.0
    %965 = vmatprep.subr.mxu0 0.0
    %966 = vmatpush1.xpose.msra.mxu0 0.0
    %967 = vmatprep.subr.mxu0 0.0
    %968 = vmatpush1.xpose.msra.mxu0 0.0
    %969 = vmatprep.subr.mxu0 0.0
    %970 = vmatpush1.xpose.msra.mxu0 0.0
    %971 = vmatprep.subr.mxu0 0.0
    %972 = vmatpush1.xpose.msra.mxu0 0.0
    %973 = vmatprep.subr.mxu0 0.0
    %974 = vmatpush1.xpose.msra.mxu0 0.0
    %975 = vmatprep.subr.mxu0 0.0
    %976 = vmatpush1.xpose.msra.mxu0 0.0
    %977 = vmatprep.subr.mxu0 0.0
    %978 = vmatpush1.xpose.msra.mxu0 0.0
    %979 = vmatprep.subr.mxu0 0.0
    %980 = vmatpush1.xpose.msra.mxu0 0.0
    %981 = vmatprep.subr.mxu0 0.0
    %982 = vmatpush1.xpose.msra.mxu0 %v951
    %983 = vmatprep.subr.mxu0 0.0
    %984 = vmatpush1.xpose.msra.mxu0 %v949
    %985 = vmatprep.subr.mxu0 0.0
    %986 = vmatpush2.xpose.msra.mxu0 0.0
    %987 = vmatprep.subr.mxu0 0.0
    %988 = vmatpush2.xpose.msra.mxu0 0.0
    %989 = vmatprep.subr.mxu0 0.0
    %990 = vmatpush2.xpose.msra.mxu0 0.0
    %991 = vmatprep.subr.mxu0 0.0
    %992 = vmatpush2.xpose.msra.mxu0 0.0
    %993 = vmatprep.subr.mxu0 0.0
    %994 = vmatpush2.xpose.msra.mxu0 0.0
    %995 = vmatprep.subr.mxu0 0.0
    %996 = vmatpush2.xpose.msra.mxu0 0.0
    %997 = vmatprep.subr.mxu0 0.0
    %998 = vmatpush2.xpose.msra.mxu0 0.0
    %999 = vmatprep.subr.mxu0 0.0
    %1000 = vmatpush2.xpose.msra.mxu0 0.0
    %1001 = vmatprep.subr.mxu0 0.0
    %1002 = vmatpush2.xpose.msra.mxu0 0.0
    %1003 = vmatprep.subr.mxu0 0.0
    %1004 = vmatpush2.xpose.msra.mxu0 0.0
    %1005 = vmatprep.subr.mxu0 0.0
    %1006 = vmatpush2.xpose.msra.mxu0 0.0
    %1007 = vmatprep.subr.mxu0 0.0
    %1008 = vmatpush2.xpose.msra.mxu0 0.0
    %1009 = vmatprep.subr.mxu0 0.0
    %1010 = vmatpush2.xpose.msra.mxu0 0.0
    %1011 = vmatprep.subr.mxu0 0.0
    %1012 = vmatpush2.xpose.msra.mxu0 0.0
    %1013 = vmatprep.subr.mxu0 0.0
    %1014 = vmatpush2.xpose.msra.mxu0 0.0
    %1015 = vmatprep.subr.mxu0 0.0
    %1016 = vmatpush2.xpose.msra.mxu0 0.0
    %1017 = vmatprep.mubr.f32.mxu0 0.0
    %1018 = vmatmul.mubr.f32.gmra.mxu0 %v947
    %v1019 = vpop.f32.mrf.mxu0
    %v1020 = vadd.f32 0.0, %v1019
    %v1021 = vpop.f32.mrf.mxu0
    %1022 = vdwg.mxu0
    %1023 = vrot.lane.b32.xlu0 %v228, 120
    %v1024 = vpop.permute.xlu0 %1023
    %1025 = vrot.lane.b32.xlu0 %v331, 120
    %v1026 = vpop.permute.xlu0 %1025
    %1027 = vrot.lane.b32.xlu0 %v336, 120
    %v1028 = vpop.permute.xlu0 %1027
    %v1029 = vsel %vm531, %v1024, 0
    %v1031 = vsel %vm531, %v1026, 0
    %v1033 = vsel %vm531, %v1028, 0
    %1035 = vmatprep.subr.mxu0 0.0
    %1036 = vmatpush1.xpose.msra.mxu0 0.0
    %1037 = vmatprep.subr.mxu0 0.0
    %1038 = vmatpush1.xpose.msra.mxu0 0.0
    %1039 = vmatprep.subr.mxu0 0.0
    %1040 = vmatpush1.xpose.msra.mxu0 0.0
    %1041 = vmatprep.subr.mxu0 0.0
    %1042 = vmatpush1.xpose.msra.mxu0 0.0
    %1043 = vmatprep.subr.mxu0 0.0
    %1044 = vmatpush1.xpose.msra.mxu0 0.0
    %1045 = vmatprep.subr.mxu0 0.0
    %1046 = vmatpush1.xpose.msra.mxu0 0.0
    %1047 = vmatprep.subr.mxu0 0.0
    %1048 = vmatpush1.xpose.msra.mxu0 0.0
    %1049 = vmatprep.subr.mxu0 0.0
    %1050 = vmatpush1.xpose.msra.mxu0 0.0
    %1051 = vmatprep.subr.mxu0 0.0
    %1052 = vmatpush1.xpose.msra.mxu0 0.0
    %1053 = vmatprep.subr.mxu0 0.0
    %1054 = vmatpush1.xpose.msra.mxu0 0.0
    %1055 = vmatprep.subr.mxu0 0.0
    %1056 = vmatpush1.xpose.msra.mxu0 0.0
    %1057 = vmatprep.subr.mxu0 0.0
    %1058 = vmatpush1.xpose.msra.mxu0 0.0
    %1059 = vmatprep.subr.mxu0 0.0
    %1060 = vmatpush1.xpose.msra.mxu0 0.0
    %1061 = vmatprep.subr.mxu0 0.0
    %1062 = vmatpush1.xpose.msra.mxu0 0.0
    %1063 = vmatprep.subr.mxu0 0.0
    %1064 = vmatpush1.xpose.msra.mxu0 %v1033
    %1065 = vmatprep.subr.mxu0 0.0
    %1066 = vmatpush1.xpose.msra.mxu0 %v1031
    %1067 = vmatprep.subr.mxu0 0.0
    %1068 = vmatpush2.xpose.msra.mxu0 0.0
    %1069 = vmatprep.subr.mxu0 0.0
    %1070 = vmatpush2.xpose.msra.mxu0 0.0
    %1071 = vmatprep.subr.mxu0 0.0
    %1072 = vmatpush2.xpose.msra.mxu0 0.0
    %1073 = vmatprep.subr.mxu0 0.0
    %1074 = vmatpush2.xpose.msra.mxu0 0.0
    %1075 = vmatprep.subr.mxu0 0.0
    %1076 = vmatpush2.xpose.msra.mxu0 0.0
    %1077 = vmatprep.subr.mxu0 0.0
    %1078 = vmatpush2.xpose.msra.mxu0 0.0
    %1079 = vmatprep.subr.mxu0 0.0
    %1080 = vmatpush2.xpose.msra.mxu0 0.0
    %1081 = vmatprep.subr.mxu0 0.0
    %1082 = vmatpush2.xpose.msra.mxu0 0.0
    %1083 = vmatprep.subr.mxu0 0.0
    %1084 = vmatpush2.xpose.msra.mxu0 0.0
    %1085 = vmatprep.subr.mxu0 0.0
    %1086 = vmatpush2.xpose.msra.mxu0 0.0
    %1087 = vmatprep.subr.mxu0 0.0
    %1088 = vmatpush2.xpose.msra.mxu0 0.0
    %1089 = vmatprep.subr.mxu0 0.0
    %1090 = vmatpush2.xpose.msra.mxu0 0.0
    %1091 = vmatprep.subr.mxu0 0.0
    %1092 = vmatpush2.xpose.msra.mxu0 0.0
    %1093 = vmatprep.subr.mxu0 0.0
    %1094 = vmatpush2.xpose.msra.mxu0 0.0
    %1095 = vmatprep.subr.mxu0 0.0
    %1096 = vmatpush2.xpose.msra.mxu0 0.0
    %1097 = vmatprep.subr.mxu0 0.0
    %1098 = vmatpush2.xpose.msra.mxu0 0.0
    %1099 = vmatprep.mubr.f32.mxu0 0.0
    %1100 = vmatmul.mubr.f32.gmra.mxu0 %v1029
    %v1101 = vpop.f32.mrf.mxu0
    %v1102 = vadd.f32 0.0, %v1101
    %v1103 = vpop.f32.mrf.mxu0
    %1104 = vdwg.mxu0
    %v1105 = vmul.f32 %v1020, 0.35355338
    %v1106 = vmul.f32 %v1102, 0.35355338
    %v1107 = vsel %vm149, %v1105, -inf
    %1108 = vmax.xlane.f32.xlu0 %v1107
    %v1109 = vpop.xlane.xlu0 %1108
    %v1110 = vsel %vm149, %v1106, -inf
    %1111 = vmax.xlane.f32.xlu0 %v1110
    %v1112 = vpop.xlane.xlu0 %1111
    %v1113 = vsub.f32 %v1105, %v1109
    %v1114 = vsub.f32 %v1106, %v1112
    %v1115 = vmul.f32 %v1113, 1.442695
    %v1116 = vpow.pop %v1115
    %v1117 = vmul.f32 %v1114, 1.442695
    %v1118 = vpow.pop %v1117
    %v1119 = vsel %vm149, %v1116, 0.0
    %1120 = vadd.xlane.f32.xlu0 %v1119
    %v1121 = vpop.xlane.xlu0 %1120
    %v1122 = vsel %vm149, %v1118, 0.0
    %1123 = vadd.xlane.f32.xlu0 %v1122
    %v1124 = vpop.xlane.xlu0 %1123
    %v1125 = vrcp.pop %v1121
    %v1126 = vmul.f32 %v1116, %v1125
    %v1127 = vrcp.pop %v1124
    %v1128 = vmul.f32 %v1118, %v1127
    %1131 = vrot.lane.b32.xlu0 %v416, 120
    %v1132 = vpop.permute.xlu0 %1131
    %1133 = vrot.lane.b32.xlu0 %v421, 120
    %v1134 = vpop.permute.xlu0 %1133
    %v1138 = vsel %vm149, %v1126, 0
    %1140 = vmatprep.subr.mxu0 0.0
    %1141 = vmatpush1.msra.mxu0 0.0
    %1142 = vmatprep.subr.mxu0 0.0
    %1143 = vmatpush1.msra.mxu0 0.0
    %1144 = vmatprep.subr.mxu0 0.0
    %1145 = vmatpush1.msra.mxu0 0.0
    %1146 = vmatprep.subr.mxu0 0.0
    %1147 = vmatpush1.msra.mxu0 0.0
    %1148 = vmatprep.subr.mxu0 0.0
    %1149 = vmatpush1.msra.mxu0 0.0
    %1150 = vmatprep.subr.mxu0 0.0
    %1151 = vmatpush1.msra.mxu0 0.0
    %1152 = vmatprep.subr.mxu0 0.0
    %1153 = vmatpush1.msra.mxu0 0.0
    %1154 = vmatprep.subr.mxu0 0.0
    %1155 = vmatpush1.msra.mxu0 0.0
    %1156 = vmatprep.subr.mxu0 0.0
    %1157 = vmatpush1.msra.mxu0 0.0
    %1158 = vmatprep.subr.mxu0 0.0
    %1159 = vmatpush1.msra.mxu0 0.0
    %1160 = vmatprep.subr.mxu0 0.0
    %1161 = vmatpush1.msra.mxu0 0.0
    %1162 = vmatprep.subr.mxu0 0.0
    %1163 = vmatpush1.msra.mxu0 0.0
    %1164 = vmatprep.subr.mxu0 0.0
    %1165 = vmatpush1.msra.mxu0 0.0
    %1166 = vmatprep.subr.mxu0 0.0
    %1167 = vmatpush1.msra.mxu0 0.0
    %1168 = vmatprep.subr.mxu0 0.0
    %1169 = vmatpush1.msra.mxu0 %v1134
    %1170 = vmatprep.subr.mxu0 0.0
    %1171 = vmatpush1.msra.mxu0 %v1132
    %1172 = vmatprep.subr.mxu0 0.0
    %1173 = vmatpush2.msra.mxu0 0.0
    %1174 = vmatprep.subr.mxu0 0.0
    %1175 = vmatpush2.msra.mxu0 0.0
    %1176 = vmatprep.subr.mxu0 0.0
    %1177 = vmatpush2.msra.mxu0 0.0
    %1178 = vmatprep.subr.mxu0 0.0
    %1179 = vmatpush2.msra.mxu0 0.0
    %1180 = vmatprep.subr.mxu0 0.0
    %1181 = vmatpush2.msra.mxu0 0.0
    %1182 = vmatprep.subr.mxu0 0.0
    %1183 = vmatpush2.msra.mxu0 0.0
    %1184 = vmatprep.subr.mxu0 0.0
    %1185 = vmatpush2.msra.mxu0 0.0
    %1186 = vmatprep.subr.mxu0 0.0
    %1187 = vmatpush2.msra.mxu0 0.0
    %1188 = vmatprep.subr.mxu0 0.0
    %1189 = vmatpush2.msra.mxu0 0.0
    %1190 = vmatprep.subr.mxu0 0.0
    %1191 = vmatpush2.msra.mxu0 0.0
    %1192 = vmatprep.subr.mxu0 0.0
    %1193 = vmatpush2.msra.mxu0 0.0
    %1194 = vmatprep.subr.mxu0 0.0
    %1195 = vmatpush2.msra.mxu0 0.0
    %1196 = vmatprep.subr.mxu0 0.0
    %1197 = vmatpush2.msra.mxu0 0.0
    %1198 = vmatprep.subr.mxu0 0.0
    %1199 = vmatpush2.msra.mxu0 0.0
    %1200 = vmatprep.subr.mxu0 0.0
    %1201 = vmatpush2.msra.mxu0 0.0
    %1202 = vmatprep.subr.mxu0 0.0
    %1203 = vmatpush2.msra.mxu0 0.0
    %1204 = vmatprep.mubr.f32.mxu0 0.0
    %1205 = vmatmul.mubr.f32.gmra.mxu0 %v1138
    %v1206 = vpop.f32.mrf.mxu0
    %v1207 = vadd.f32 0.0, %v1206
    %v1208 = vpop.f32.mrf.mxu0
    %1209 = vdwg.mxu0
    %1212 = vrot.lane.b32.xlu0 %v426, 120
    %v1213 = vpop.permute.xlu0 %1212
    %1214 = vrot.lane.b32.xlu0 %v431, 120
    %v1215 = vpop.permute.xlu0 %1214
    %v1219 = vsel %vm149, %v1128, 0
    %1221 = vmatprep.subr.mxu0 0.0
    %1222 = vmatpush1.msra.mxu0 0.0
    %1223 = vmatprep.subr.mxu0 0.0
    %1224 = vmatpush1.msra.mxu0 0.0
    %1225 = vmatprep.subr.mxu0 0.0
    %1226 = vmatpush1.msra.mxu0 0.0
    %1227 = vmatprep.subr.mxu0 0.0
    %1228 = vmatpush1.msra.mxu0 0.0
    %1229 = vmatprep.subr.mxu0 0.0
    %1230 = vmatpush1.msra.mxu0 0.0
    %1231 = vmatprep.subr.mxu0 0.0
    %1232 = vmatpush1.msra.mxu0 0.0
    %1233 = vmatprep.subr.mxu0 0.0
    %1234 = vmatpush1.msra.mxu0 0.0
    %1235 = vmatprep.subr.mxu0 0.0
    %1236 = vmatpush1.msra.mxu0 0.0
    %1237 = vmatprep.subr.mxu0 0.0
    %1238 = vmatpush1.msra.mxu0 0.0
    %1239 = vmatprep.subr.mxu0 0.0
    %1240 = vmatpush1.msra.mxu0 0.0
    %1241 = vmatprep.subr.mxu0 0.0
    %1242 = vmatpush1.msra.mxu0 0.0
    %1243 = vmatprep.subr.mxu0 0.0
    %1244 = vmatpush1.msra.mxu0 0.0
    %1245 = vmatprep.subr.mxu0 0.0
    %1246 = vmatpush1.msra.mxu0 0.0
    %1247 = vmatprep.subr.mxu0 0.0
    %1248 = vmatpush1.msra.mxu0 0.0
    %1249 = vmatprep.subr.mxu0 0.0
    %1250 = vmatpush1.msra.mxu0 %v1215
    %1251 = vmatprep.subr.mxu0 0.0
    %1252 = vmatpush1.msra.mxu0 %v1213
    %1253 = vmatprep.subr.mxu0 0.0
    %1254 = vmatpush2.msra.mxu0 0.0
    %1255 = vmatprep.subr.mxu0 0.0
    %1256 = vmatpush2.msra.mxu0 0.0
    %1257 = vmatprep.subr.mxu0 0.0
    %1258 = vmatpush2.msra.mxu0 0.0
    %1259 = vmatprep.subr.mxu0 0.0
    %1260 = vmatpush2.msra.mxu0 0.0
    %1261 = vmatprep.subr.mxu0 0.0
    %1262 = vmatpush2.msra.mxu0 0.0
    %1263 = vmatprep.subr.mxu0 0.0
    %1264 = vmatpush2.msra.mxu0 0.0
    %1265 = vmatprep.subr.mxu0 0.0
    %1266 = vmatpush2.msra.mxu0 0.0
    %1267 = vmatprep.subr.mxu0 0.0
    %1268 = vmatpush2.msra.mxu0 0.0
    %1269 = vmatprep.subr.mxu0 0.0
    %1270 = vmatpush2.msra.mxu0 0.0
    %1271 = vmatprep.subr.mxu0 0.0
    %1272 = vmatpush2.msra.mxu0 0.0
    %1273 = vmatprep.subr.mxu0 0.0
    %1274 = vmatpush2.msra.mxu0 0.0
    %1275 = vmatprep.subr.mxu0 0.0
    %1276 = vmatpush2.msra.mxu0 0.0
    %1277 = vmatprep.subr.mxu0 0.0
    %1278 = vmatpush2.msra.mxu0 0.0
    %1279 = vmatprep.subr.mxu0 0.0
    %1280 = vmatpush2.msra.mxu0 0.0
    %1281 = vmatprep.subr.mxu0 0.0
    %1282 = vmatpush2.msra.mxu0 0.0
    %1283 = vmatprep.subr.mxu0 0.0
    %1284 = vmatpush2.msra.mxu0 0.0
    %1285 = vmatprep.mubr.f32.mxu0 0.0
    %1286 = vmatmul.mubr.f32.gmra.mxu0 %v1219
    %v1287 = vpop.f32.mrf.mxu0
    %v1288 = vadd.f32 0.0, %v1287
    %v1289 = vpop.f32.mrf.mxu0
    %1290 = vdwg.mxu0
    %v1292 = vsel %vm531, %v1207, 0
    %v1295 = vsel %vm531, %v1288, 0
    %1297 = vmatprep.subr.mxu0 0.0
    %1298 = vmatpush1.msra.mxu0 0.0
    %1299 = vmatprep.subr.mxu0 0.0
    %1300 = vmatpush1.msra.mxu0 0.0
    %1301 = vmatprep.subr.mxu0 0.0
    %1302 = vmatpush1.msra.mxu0 0.0
    %1303 = vmatprep.subr.mxu0 0.0
    %1304 = vmatpush1.msra.mxu0 0.0
    %1305 = vmatprep.subr.mxu0 0.0
    %1306 = vmatpush1.msra.mxu0 0.0
    %1307 = vmatprep.subr.mxu0 0.0
    %1308 = vmatpush1.msra.mxu0 0.0
    %1309 = vmatprep.subr.mxu0 0.0
    %1310 = vmatpush1.msra.mxu0 0.0
    %1311 = vmatprep.subr.mxu0 0.0
    %1312 = vmatpush1.msra.mxu0 0.0
    %1313 = vmatprep.subr.mxu0 0.0
    %1314 = vmatpush1.msra.mxu0 0.0
    %1315 = vmatprep.subr.mxu0 0.0
    %1316 = vmatpush1.msra.mxu0 0.0
    %1317 = vmatprep.subr.mxu0 0.0
    %1318 = vmatpush1.msra.mxu0 0.0
    %1319 = vmatprep.subr.mxu0 0.0
    %1320 = vmatpush1.msra.mxu0 0.0
    %1321 = vmatprep.subr.mxu0 0.0
    %1322 = vmatpush1.msra.mxu0 0.0
    %1323 = vmatprep.subr.mxu0 0.0
    %1324 = vmatpush1.msra.mxu0 0.0
    %1325 = vmatprep.subr.mxu0 0.0
    %1326 = vmatpush1.msra.mxu0 0.0
    %1327 = vmatprep.subr.mxu0 0.0
    %1328 = vmatpush1.msra.mxu0 %v528
    %1329 = vmatprep.subr.mxu0 0.0
    %1330 = vmatpush2.msra.mxu0 0.0
    %1331 = vmatprep.subr.mxu0 0.0
    %1332 = vmatpush2.msra.mxu0 0.0
    %1333 = vmatprep.subr.mxu0 0.0
    %1334 = vmatpush2.msra.mxu0 0.0
    %1335 = vmatprep.subr.mxu0 0.0
    %1336 = vmatpush2.msra.mxu0 0.0
    %1337 = vmatprep.subr.mxu0 0.0
    %1338 = vmatpush2.msra.mxu0 0.0
    %1339 = vmatprep.subr.mxu0 0.0
    %1340 = vmatpush2.msra.mxu0 0.0
    %1341 = vmatprep.subr.mxu0 0.0
    %1342 = vmatpush2.msra.mxu0 0.0
    %1343 = vmatprep.subr.mxu0 0.0
    %1344 = vmatpush2.msra.mxu0 0.0
    %1345 = vmatprep.subr.mxu0 0.0
    %1346 = vmatpush2.msra.mxu0 0.0
    %1347 = vmatprep.subr.mxu0 0.0
    %1348 = vmatpush2.msra.mxu0 0.0
    %1349 = vmatprep.subr.mxu0 0.0
    %1350 = vmatpush2.msra.mxu0 0.0
    %1351 = vmatprep.subr.mxu0 0.0
    %1352 = vmatpush2.msra.mxu0 0.0
    %1353 = vmatprep.subr.mxu0 0.0
    %1354 = vmatpush2.msra.mxu0 0.0
    %1355 = vmatprep.subr.mxu0 0.0
    %1356 = vmatpush2.msra.mxu0 0.0
    %1357 = vmatprep.subr.mxu0 0.0
    %1358 = vmatpush2.msra.mxu0 0.0
    %1359 = vmatprep.subr.mxu0 0.0
    %1360 = vmatpush2.msra.mxu0 0.0
    %1361 = vmatprep.mubr.f32.mxu0 0.0
    %1362 = vmatmul.mubr.f32.gmra.mxu0 %v1292
    %v1363 = vpop.f32.mrf.mxu0
    %v1364 = vadd.f32 0.0, %v1363
    %v1365 = vpop.f32.mrf.mxu0
    %1366 = vmatprep.mubr.f32.mxu0 0.0
    %1367 = vmatmul.mubr.f32.gmra.mxu0 %v1295
    %v1368 = vpop.f32.mrf.mxu0
    %v1369 = vadd.f32 0.0, %v1368
    %v1370 = vpop.f32.mrf.mxu0
    %1371 = vdwg.mxu0
    %v1372 = vadd.f32 %v939, %v1364
    %v1373 = vadd.f32 %v940, %v1369
    %1374 = vrot.lane.b32.xlu0 %v223, 112
    %v1375 = vpop.permute.xlu0 %1374
    %1376 = vrot.lane.b32.xlu0 %v321, 112
    %v1377 = vpop.permute.xlu0 %1376
    %1378 = vrot.lane.b32.xlu0 %v326, 112
    %v1379 = vpop.permute.xlu0 %1378
    %v1380 = vsel %vm531, %v1375, 0
    %v1382 = vsel %vm531, %v1377, 0
    %v1384 = vsel %vm531, %v1379, 0
    %1386 = vmatprep.subr.mxu0 0.0
    %1387 = vmatpush1.xpose.msra.mxu0 0.0
    %1388 = vmatprep.subr.mxu0 0.0
    %1389 = vmatpush1.xpose.msra.mxu0 0.0
    %1390 = vmatprep.subr.mxu0 0.0
    %1391 = vmatpush1.xpose.msra.mxu0 0.0
    %1392 = vmatprep.subr.mxu0 0.0
    %1393 = vmatpush1.xpose.msra.mxu0 0.0
    %1394 = vmatprep.subr.mxu0 0.0
    %1395 = vmatpush1.xpose.msra.mxu0 0.0
    %1396 = vmatprep.subr.mxu0 0.0
    %1397 = vmatpush1.xpose.msra.mxu0 0.0
    %1398 = vmatprep.subr.mxu0 0.0
    %1399 = vmatpush1.xpose.msra.mxu0 0.0
    %1400 = vmatprep.subr.mxu0 0.0
    %1401 = vmatpush1.xpose.msra.mxu0 0.0
    %1402 = vmatprep.subr.mxu0 0.0
    %1403 = vmatpush1.xpose.msra.mxu0 0.0
    %1404 = vmatprep.subr.mxu0 0.0
    %1405 = vmatpush1.xpose.msra.mxu0 0.0
    %1406 = vmatprep.subr.mxu0 0.0
    %1407 = vmatpush1.xpose.msra.mxu0 0.0
    %1408 = vmatprep.subr.mxu0 0.0
    %1409 = vmatpush1.xpose.msra.mxu0 0.0
    %1410 = vmatprep.subr.mxu0 0.0
    %1411 = vmatpush1.xpose.msra.mxu0 0.0
    %1412 = vmatprep.subr.mxu0 0.0
    %1413 = vmatpush1.xpose.msra.mxu0 0.0
    %1414 = vmatprep.subr.mxu0 0.0
    %1415 = vmatpush1.xpose.msra.mxu0 %v1384
    %1416 = vmatprep.subr.mxu0 0.0
    %1417 = vmatpush1.xpose.msra.mxu0 %v1382
    %1418 = vmatprep.subr.mxu0 0.0
    %1419 = vmatpush2.xpose.msra.mxu0 0.0
    %1420 = vmatprep.subr.mxu0 0.0
    %1421 = vmatpush2.xpose.msra.mxu0 0.0
    %1422 = vmatprep.subr.mxu0 0.0
    %1423 = vmatpush2.xpose.msra.mxu0 0.0
    %1424 = vmatprep.subr.mxu0 0.0
    %1425 = vmatpush2.xpose.msra.mxu0 0.0
    %1426 = vmatprep.subr.mxu0 0.0
    %1427 = vmatpush2.xpose.msra.mxu0 0.0
    %1428 = vmatprep.subr.mxu0 0.0
    %1429 = vmatpush2.xpose.msra.mxu0 0.0
    %1430 = vmatprep.subr.mxu0 0.0
    %1431 = vmatpush2.xpose.msra.mxu0 0.0
    %1432 = vmatprep.subr.mxu0 0.0
    %1433 = vmatpush2.xpose.msra.mxu0 0.0
    %1434 = vmatprep.subr.mxu0 0.0
    %1435 = vmatpush2.xpose.msra.mxu0 0.0
    %1436 = vmatprep.subr.mxu0 0.0
    %1437 = vmatpush2.xpose.msra.mxu0 0.0
    %1438 = vmatprep.subr.mxu0 0.0
    %1439 = vmatpush2.xpose.msra.mxu0 0.0
    %1440 = vmatprep.subr.mxu0 0.0
    %1441 = vmatpush2.xpose.msra.mxu0 0.0
    %1442 = vmatprep.subr.mxu0 0.0
    %1443 = vmatpush2.xpose.msra.mxu0 0.0
    %1444 = vmatprep.subr.mxu0 0.0
    %1445 = vmatpush2.xpose.msra.mxu0 0.0
    %1446 = vmatprep.subr.mxu0 0.0
    %1447 = vmatpush2.xpose.msra.mxu0 0.0
    %1448 = vmatprep.subr.mxu0 0.0
    %1449 = vmatpush2.xpose.msra.mxu0 0.0
    %1450 = vmatprep.mubr.f32.mxu0 0.0
    %1451 = vmatmul.mubr.f32.gmra.mxu0 %v1380
    %v1452 = vpop.f32.mrf.mxu0
    %v1453 = vadd.f32 0.0, %v1452
    %v1454 = vpop.f32.mrf.mxu0
    %1455 = vdwg.mxu0
    %1456 = vrot.lane.b32.xlu0 %v228, 112
    %v1457 = vpop.permute.xlu0 %1456
    %1458 = vrot.lane.b32.xlu0 %v331, 112
    %v1459 = vpop.permute.xlu0 %1458
    %1460 = vrot.lane.b32.xlu0 %v336, 112
    %v1461 = vpop.permute.xlu0 %1460
    %v1462 = vsel %vm531, %v1457, 0
    %v1464 = vsel %vm531, %v1459, 0
    %v1466 = vsel %vm531, %v1461, 0
    %1468 = vmatprep.subr.mxu0 0.0
    %1469 = vmatpush1.xpose.msra.mxu0 0.0
    %1470 = vmatprep.subr.mxu0 0.0
    %1471 = vmatpush1.xpose.msra.mxu0 0.0
    %1472 = vmatprep.subr.mxu0 0.0
    %1473 = vmatpush1.xpose.msra.mxu0 0.0
    %1474 = vmatprep.subr.mxu0 0.0
    %1475 = vmatpush1.xpose.msra.mxu0 0.0
    %1476 = vmatprep.subr.mxu0 0.0
    %1477 = vmatpush1.xpose.msra.mxu0 0.0
    %1478 = vmatprep.subr.mxu0 0.0
    %1479 = vmatpush1.xpose.msra.mxu0 0.0
    %1480 = vmatprep.subr.mxu0 0.0
    %1481 = vmatpush1.xpose.msra.mxu0 0.0
    %1482 = vmatprep.subr.mxu0 0.0
    %1483 = vmatpush1.xpose.msra.mxu0 0.0
    %1484 = vmatprep.subr.mxu0 0.0
    %1485 = vmatpush1.xpose.msra.mxu0 0.0
    %1486 = vmatprep.subr.mxu0 0.0
    %1487 = vmatpush1.xpose.msra.mxu0 0.0
    %1488 = vmatprep.subr.mxu0 0.0
    %1489 = vmatpush1.xpose.msra.mxu0 0.0
    %1490 = vmatprep.subr.mxu0 0.0
    %1491 = vmatpush1.xpose.msra.mxu0 0.0
    %1492 = vmatprep.subr.mxu0 0.0
    %1493 = vmatpush1.xpose.msra.mxu0 0.0
    %1494 = vmatprep.subr.mxu0 0.0
    %1495 = vmatpush1.xpose.msra.mxu0 0.0
    %1496 = vmatprep.subr.mxu0 0.0
    %1497 = vmatpush1.xpose.msra.mxu0 %v1466
    %1498 = vmatprep.subr.mxu0 0.0
    %1499 = vmatpush1.xpose.msra.mxu0 %v1464
    %1500 = vmatprep.subr.mxu0 0.0
    %1501 = vmatpush2.xpose.msra.mxu0 0.0
    %1502 = vmatprep.subr.mxu0 0.0
    %1503 = vmatpush2.xpose.msra.mxu0 0.0
    %1504 = vmatprep.subr.mxu0 0.0
    %1505 = vmatpush2.xpose.msra.mxu0 0.0
    %1506 = vmatprep.subr.mxu0 0.0
    %1507 = vmatpush2.xpose.msra.mxu0 0.0
    %1508 = vmatprep.subr.mxu0 0.0
    %1509 = vmatpush2.xpose.msra.mxu0 0.0
    %1510 = vmatprep.subr.mxu0 0.0
    %1511 = vmatpush2.xpose.msra.mxu0 0.0
    %1512 = vmatprep.subr.mxu0 0.0
    %1513 = vmatpush2.xpose.msra.mxu0 0.0
    %1514 = vmatprep.subr.mxu0 0.0
    %1515 = vmatpush2.xpose.msra.mxu0 0.0
    %1516 = vmatprep.subr.mxu0 0.0
    %1517 = vmatpush2.xpose.msra.mxu0 0.0
    %1518 = vmatprep.subr.mxu0 0.0
    %1519 = vmatpush2.xpose.msra.mxu0 0.0
    %1520 = vmatprep.subr.mxu0 0.0
    %1521 = vmatpush2.xpose.msra.mxu0 0.0
    %1522 = vmatprep.subr.mxu0 0.0
    %1523 = vmatpush2.xpose.msra.mxu0 0.0
    %1524 = vmatprep.subr.mxu0 0.0
    %1525 = vmatpush2.xpose.msra.mxu0 0.0
    %1526 = vmatprep.subr.mxu0 0.0
    %1527 = vmatpush2.xpose.msra.mxu0 0.0
    %1528 = vmatprep.subr.mxu0 0.0
    %1529 = vmatpush2.xpose.msra.mxu0 0.0
    %1530 = vmatprep.subr.mxu0 0.0
    %1531 = vmatpush2.xpose.msra.mxu0 0.0
    %1532 = vmatprep.mubr.f32.mxu0 0.0
    %1533 = vmatmul.mubr.f32.gmra.mxu0 %v1462
    %v1534 = vpop.f32.mrf.mxu0
    %v1535 = vadd.f32 0.0, %v1534
    %v1536 = vpop.f32.mrf.mxu0
    %1537 = vdwg.mxu0
    %v1538 = vmul.f32 %v1453, 0.35355338
    %v1539 = vmul.f32 %v1535, 0.35355338
    %v1540 = vsel %vm149, %v1538, -inf
    %1541 = vmax.xlane.f32.xlu0 %v1540
    %v1542 = vpop.xlane.xlu0 %1541
    %v1543 = vsel %vm149, %v1539, -inf
    %1544 = vmax.xlane.f32.xlu0 %v1543
    %v1545 = vpop.xlane.xlu0 %1544
    %v1546 = vsub.f32 %v1538, %v1542
    %v1547 = vsub.f32 %v1539, %v1545
    %v1548 = vmul.f32 %v1546, 1.442695
    %v1549 = vpow.pop %v1548
    %v1550 = vmul.f32 %v1547, 1.442695
    %v1551 = vpow.pop %v1550
    %v1552 = vsel %vm149, %v1549, 0.0
    %1553 = vadd.xlane.f32.xlu0 %v1552
    %v1554 = vpop.xlane.xlu0 %1553
    %v1555 = vsel %vm149, %v1551, 0.0
    %1556 = vadd.xlane.f32.xlu0 %v1555
    %v1557 = vpop.xlane.xlu0 %1556
    %v1558 = vrcp.pop %v1554
    %v1559 = vmul.f32 %v1549, %v1558
    %v1560 = vrcp.pop %v1557
    %v1561 = vmul.f32 %v1551, %v1560
    %1562 = vrot.lane.b32.xlu0 %v416, 112
    %v1563 = vpop.permute.xlu0 %1562
    %1564 = vrot.lane.b32.xlu0 %v421, 112
    %v1565 = vpop.permute.xlu0 %1564
    %v1569 = vsel %vm149, %v1559, 0
    %1571 = vmatprep.subr.mxu0 0.0
    %1572 = vmatpush1.msra.mxu0 0.0
    %1573 = vmatprep.subr.mxu0 0.0
    %1574 = vmatpush1.msra.mxu0 0.0
    %1575 = vmatprep.subr.mxu0 0.0
    %1576 = vmatpush1.msra.mxu0 0.0
    %1577 = vmatprep.subr.mxu0 0.0
    %1578 = vmatpush1.msra.mxu0 0.0
    %1579 = vmatprep.subr.mxu0 0.0
    %1580 = vmatpush1.msra.mxu0 0.0
    %1581 = vmatprep.subr.mxu0 0.0
    %1582 = vmatpush1.msra.mxu0 0.0
    %1583 = vmatprep.subr.mxu0 0.0
    %1584 = vmatpush1.msra.mxu0 0.0
    %1585 = vmatprep.subr.mxu0 0.0
    %1586 = vmatpush1.msra.mxu0 0.0
    %1587 = vmatprep.subr.mxu0 0.0
    %1588 = vmatpush1.msra.mxu0 0.0
    %1589 = vmatprep.subr.mxu0 0.0
    %1590 = vmatpush1.msra.mxu0 0.0
    %1591 = vmatprep.subr.mxu0 0.0
    %1592 = vmatpush1.msra.mxu0 0.0
    %1593 = vmatprep.subr.mxu0 0.0
    %1594 = vmatpush1.msra.mxu0 0.0
    %1595 = vmatprep.subr.mxu0 0.0
    %1596 = vmatpush1.msra.mxu0 0.0
    %1597 = vmatprep.subr.mxu0 0.0
    %1598 = vmatpush1.msra.mxu0 0.0
    %1599 = vmatprep.subr.mxu0 0.0
    %1600 = vmatpush1.msra.mxu0 %v1565
    %1601 = vmatprep.subr.mxu0 0.0
    %1602 = vmatpush1.msra.mxu0 %v1563
    %1603 = vmatprep.subr.mxu0 0.0
    %1604 = vmatpush2.msra.mxu0 0.0
    %1605 = vmatprep.subr.mxu0 0.0
    %1606 = vmatpush2.msra.mxu0 0.0
    %1607 = vmatprep.subr.mxu0 0.0
    %1608 = vmatpush2.msra.mxu0 0.0
    %1609 = vmatprep.subr.mxu0 0.0
    %1610 = vmatpush2.msra.mxu0 0.0
    %1611 = vmatprep.subr.mxu0 0.0
    %1612 = vmatpush2.msra.mxu0 0.0
    %1613 = vmatprep.subr.mxu0 0.0
    %1614 = vmatpush2.msra.mxu0 0.0
    %1615 = vmatprep.subr.mxu0 0.0
    %1616 = vmatpush2.msra.mxu0 0.0
    %1617 = vmatprep.subr.mxu0 0.0
    %1618 = vmatpush2.msra.mxu0 0.0
    %1619 = vmatprep.subr.mxu0 0.0
    %1620 = vmatpush2.msra.mxu0 0.0
    %1621 = vmatprep.subr.mxu0 0.0
    %1622 = vmatpush2.msra.mxu0 0.0
    %1623 = vmatprep.subr.mxu0 0.0
    %1624 = vmatpush2.msra.mxu0 0.0
    %1625 = vmatprep.subr.mxu0 0.0
    %1626 = vmatpush2.msra.mxu0 0.0
    %1627 = vmatprep.subr.mxu0 0.0
    %1628 = vmatpush2.msra.mxu0 0.0
    %1629 = vmatprep.subr.mxu0 0.0
    %1630 = vmatpush2.msra.mxu0 0.0
    %1631 = vmatprep.subr.mxu0 0.0
    %1632 = vmatpush2.msra.mxu0 0.0
    %1633 = vmatprep.subr.mxu0 0.0
    %1634 = vmatpush2.msra.mxu0 0.0
    %1635 = vmatprep.mubr.f32.mxu0 0.0
    %1636 = vmatmul.mubr.f32.gmra.mxu0 %v1569
    %v1637 = vpop.f32.mrf.mxu0
    %v1638 = vadd.f32 0.0, %v1637
    %v1639 = vpop.f32.mrf.mxu0
    %1640 = vdwg.mxu0
    %1641 = vrot.lane.b32.xlu0 %v426, 112
    %v1642 = vpop.permute.xlu0 %1641
    %1643 = vrot.lane.b32.xlu0 %v431, 112
    %v1644 = vpop.permute.xlu0 %1643
    %v1648 = vsel %vm149, %v1561, 0
    %1650 = vmatprep.subr.mxu0 0.0
    %1651 = vmatpush1.msra.mxu0 0.0
    %1652 = vmatprep.subr.mxu0 0.0
    %1653 = vmatpush1.msra.mxu0 0.0
    %1654 = vmatprep.subr.mxu0 0.0
    %1655 = vmatpush1.msra.mxu0 0.0
    %1656 = vmatprep.subr.mxu0 0.0
    %1657 = vmatpush1.msra.mxu0 0.0
    %1658 = vmatprep.subr.mxu0 0.0
    %1659 = vmatpush1.msra.mxu0 0.0
    %1660 = vmatprep.subr.mxu0 0.0
    %1661 = vmatpush1.msra.mxu0 0.0
    %1662 = vmatprep.subr.mxu0 0.0
    %1663 = vmatpush1.msra.mxu0 0.0
    %1664 = vmatprep.subr.mxu0 0.0
    %1665 = vmatpush1.msra.mxu0 0.0
    %1666 = vmatprep.subr.mxu0 0.0
    %1667 = vmatpush1.msra.mxu0 0.0
    %1668 = vmatprep.subr.mxu0 0.0
    %1669 = vmatpush1.msra.mxu0 0.0
    %1670 = vmatprep.subr.mxu0 0.0
    %1671 = vmatpush1.msra.mxu0 0.0
    %1672 = vmatprep.subr.mxu0 0.0
    %1673 = vmatpush1.msra.mxu0 0.0
    %1674 = vmatprep.subr.mxu0 0.0
    %1675 = vmatpush1.msra.mxu0 0.0
    %1676 = vmatprep.subr.mxu0 0.0
    %1677 = vmatpush1.msra.mxu0 0.0
    %1678 = vmatprep.subr.mxu0 0.0
    %1679 = vmatpush1.msra.mxu0 %v1644
    %1680 = vmatprep.subr.mxu0 0.0
    %1681 = vmatpush1.msra.mxu0 %v1642
    %1682 = vmatprep.subr.mxu0 0.0
    %1683 = vmatpush2.msra.mxu0 0.0
    %1684 = vmatprep.subr.mxu0 0.0
    %1685 = vmatpush2.msra.mxu0 0.0
    %1686 = vmatprep.subr.mxu0 0.0
    %1687 = vmatpush2.msra.mxu0 0.0
    %1688 = vmatprep.subr.mxu0 0.0
    %1689 = vmatpush2.msra.mxu0 0.0
    %1690 = vmatprep.subr.mxu0 0.0
    %1691 = vmatpush2.msra.mxu0 0.0
    %1692 = vmatprep.subr.mxu0 0.0
    %1693 = vmatpush2.msra.mxu0 0.0
    %1694 = vmatprep.subr.mxu0 0.0
    %1695 = vmatpush2.msra.mxu0 0.0
    %1696 = vmatprep.subr.mxu0 0.0
    %1697 = vmatpush2.msra.mxu0 0.0
    %1698 = vmatprep.subr.mxu0 0.0
    %1699 = vmatpush2.msra.mxu0 0.0
    %1700 = vmatprep.subr.mxu0 0.0
    %1701 = vmatpush2.msra.mxu0 0.0
    %1702 = vmatprep.subr.mxu0 0.0
    %1703 = vmatpush2.msra.mxu0 0.0
    %1704 = vmatprep.subr.mxu0 0.0
    %1705 = vmatpush2.msra.mxu0 0.0
    %1706 = vmatprep.subr.mxu0 0.0
    %1707 = vmatpush2.msra.mxu0 0.0
    %1708 = vmatprep.subr.mxu0 0.0
    %1709 = vmatpush2.msra.mxu0 0.0
    %1710 = vmatprep.subr.mxu0 0.0
    %1711 = vmatpush2.msra.mxu0 0.0
    %1712 = vmatprep.subr.mxu0 0.0
    %1713 = vmatpush2.msra.mxu0 0.0
    %1714 = vmatprep.mubr.f32.mxu0 0.0
    %1715 = vmatmul.mubr.f32.gmra.mxu0 %v1648
    %v1716 = vpop.f32.mrf.mxu0
    %v1717 = vadd.f32 0.0, %v1716
    %v1718 = vpop.f32.mrf.mxu0
    %1719 = vdwg.mxu0
    %v1721 = vsel %vm531, %v1638, 0
    %v1724 = vsel %vm531, %v1717, 0
    %1726 = vmatprep.subr.mxu0 0.0
    %1727 = vmatpush1.msra.mxu0 0.0
    %1728 = vmatprep.subr.mxu0 0.0
    %1729 = vmatpush1.msra.mxu0 0.0
    %1730 = vmatprep.subr.mxu0 0.0
    %1731 = vmatpush1.msra.mxu0 0.0
    %1732 = vmatprep.subr.mxu0 0.0
    %1733 = vmatpush1.msra.mxu0 0.0
    %1734 = vmatprep.subr.mxu0 0.0
    %1735 = vmatpush1.msra.mxu0 0.0
    %1736 = vmatprep.subr.mxu0 0.0
    %1737 = vmatpush1.msra.mxu0 0.0
    %1738 = vmatprep.subr.mxu0 0.0
    %1739 = vmatpush1.msra.mxu0 0.0
    %1740 = vmatprep.subr.mxu0 0.0
    %1741 = vmatpush1.msra.mxu0 0.0
    %1742 = vmatprep.subr.mxu0 0.0
    %1743 = vmatpush1.msra.mxu0 0.0
    %1744 = vmatprep.subr.mxu0 0.0
    %1745 = vmatpush1.msra.mxu0 0.0
    %1746 = vmatprep.subr.mxu0 0.0
    %1747 = vmatpush1.msra.mxu0 0.0
    %1748 = vmatprep.subr.mxu0 0.0
    %1749 = vmatpush1.msra.mxu0 0.0
    %1750 = vmatprep.subr.mxu0 0.0
    %1751 = vmatpush1.msra.mxu0 0.0
    %1752 = vmatprep.subr.mxu0 0.0
    %1753 = vmatpush1.msra.mxu0 0.0
    %1754 = vmatprep.subr.mxu0 0.0
    %1755 = vmatpush1.msra.mxu0 0.0
    %1756 = vmatprep.subr.mxu0 0.0
    %1757 = vmatpush1.msra.mxu0 %v529
    %1758 = vmatprep.subr.mxu0 0.0
    %1759 = vmatpush2.msra.mxu0 0.0
    %1760 = vmatprep.subr.mxu0 0.0
    %1761 = vmatpush2.msra.mxu0 0.0
    %1762 = vmatprep.subr.mxu0 0.0
    %1763 = vmatpush2.msra.mxu0 0.0
    %1764 = vmatprep.subr.mxu0 0.0
    %1765 = vmatpush2.msra.mxu0 0.0
    %1766 = vmatprep.subr.mxu0 0.0
    %1767 = vmatpush2.msra.mxu0 0.0
    %1768 = vmatprep.subr.mxu0 0.0
    %1769 = vmatpush2.msra.mxu0 0.0
    %1770 = vmatprep.subr.mxu0 0.0
    %1771 = vmatpush2.msra.mxu0 0.0
    %1772 = vmatprep.subr.mxu0 0.0
    %1773 = vmatpush2.msra.mxu0 0.0
    %1774 = vmatprep.subr.mxu0 0.0
    %1775 = vmatpush2.msra.mxu0 0.0
    %1776 = vmatprep.subr.mxu0 0.0
    %1777 = vmatpush2.msra.mxu0 0.0
    %1778 = vmatprep.subr.mxu0 0.0
    %1779 = vmatpush2.msra.mxu0 0.0
    %1780 = vmatprep.subr.mxu0 0.0
    %1781 = vmatpush2.msra.mxu0 0.0
    %1782 = vmatprep.subr.mxu0 0.0
    %1783 = vmatpush2.msra.mxu0 0.0
    %1784 = vmatprep.subr.mxu0 0.0
    %1785 = vmatpush2.msra.mxu0 0.0
    %1786 = vmatprep.subr.mxu0 0.0
    %1787 = vmatpush2.msra.mxu0 0.0
    %1788 = vmatprep.subr.mxu0 0.0
    %1789 = vmatpush2.msra.mxu0 0.0
    %1790 = vmatprep.mubr.f32.mxu0 0.0
    %1791 = vmatmul.mubr.f32.gmra.mxu0 %v1721
    %v1792 = vpop.f32.mrf.mxu0
    %v1793 = vadd.f32 0.0, %v1792
    %v1794 = vpop.f32.mrf.mxu0
    %1795 = vmatprep.mubr.f32.mxu0 0.0
    %1796 = vmatmul.mubr.f32.gmra.mxu0 %v1724
    %v1797 = vpop.f32.mrf.mxu0
    %v1798 = vadd.f32 0.0, %v1797
    %v1799 = vpop.f32.mrf.mxu0
    %1800 = vdwg.mxu0
    %v1801 = vadd.f32 %v1372, %v1793
    %v1802 = vadd.f32 %v1373, %v1798
    %1803 = vrot.lane.b32.xlu0 %v223, 104
    %v1804 = vpop.permute.xlu0 %1803
    %1805 = vrot.lane.b32.xlu0 %v321, 104
    %v1806 = vpop.permute.xlu0 %1805
    %1807 = vrot.lane.b32.xlu0 %v326, 104
    %v1808 = vpop.permute.xlu0 %1807
    %v1809 = vsel %vm531, %v1804, 0
    %v1811 = vsel %vm531, %v1806, 0
    %v1813 = vsel %vm531, %v1808, 0
    %1815 = vmatprep.subr.mxu0 0.0
    %1816 = vmatpush1.xpose.msra.mxu0 0.0
    %1817 = vmatprep.subr.mxu0 0.0
    %1818 = vmatpush1.xpose.msra.mxu0 0.0
    %1819 = vmatprep.subr.mxu0 0.0
    %1820 = vmatpush1.xpose.msra.mxu0 0.0
    %1821 = vmatprep.subr.mxu0 0.0
    %1822 = vmatpush1.xpose.msra.mxu0 0.0
    %1823 = vmatprep.subr.mxu0 0.0
    %1824 = vmatpush1.xpose.msra.mxu0 0.0
    %1825 = vmatprep.subr.mxu0 0.0
    %1826 = vmatpush1.xpose.msra.mxu0 0.0
    %1827 = vmatprep.subr.mxu0 0.0
    %1828 = vmatpush1.xpose.msra.mxu0 0.0
    %1829 = vmatprep.subr.mxu0 0.0
    %1830 = vmatpush1.xpose.msra.mxu0 0.0
    %1831 = vmatprep.subr.mxu0 0.0
    %1832 = vmatpush1.xpose.msra.mxu0 0.0
    %1833 = vmatprep.subr.mxu0 0.0
    %1834 = vmatpush1.xpose.msra.mxu0 0.0
    %1835 = vmatprep.subr.mxu0 0.0
    %1836 = vmatpush1.xpose.msra.mxu0 0.0
    %1837 = vmatprep.subr.mxu0 0.0
    %1838 = vmatpush1.xpose.msra.mxu0 0.0
    %1839 = vmatprep.subr.mxu0 0.0
    %1840 = vmatpush1.xpose.msra.mxu0 0.0
    %1841 = vmatprep.subr.mxu0 0.0
    %1842 = vmatpush1.xpose.msra.mxu0 0.0
    %1843 = vmatprep.subr.mxu0 0.0
    %1844 = vmatpush1.xpose.msra.mxu0 %v1813
    %1845 = vmatprep.subr.mxu0 0.0
    %1846 = vmatpush1.xpose.msra.mxu0 %v1811
    %1847 = vmatprep.subr.mxu0 0.0
    %1848 = vmatpush2.xpose.msra.mxu0 0.0
    %1849 = vmatprep.subr.mxu0 0.0
    %1850 = vmatpush2.xpose.msra.mxu0 0.0
    %1851 = vmatprep.subr.mxu0 0.0
    %1852 = vmatpush2.xpose.msra.mxu0 0.0
    %1853 = vmatprep.subr.mxu0 0.0
    %1854 = vmatpush2.xpose.msra.mxu0 0.0
    %1855 = vmatprep.subr.mxu0 0.0
    %1856 = vmatpush2.xpose.msra.mxu0 0.0
    %1857 = vmatprep.subr.mxu0 0.0
    %1858 = vmatpush2.xpose.msra.mxu0 0.0
    %1859 = vmatprep.subr.mxu0 0.0
    %1860 = vmatpush2.xpose.msra.mxu0 0.0
    %1861 = vmatprep.subr.mxu0 0.0
    %1862 = vmatpush2.xpose.msra.mxu0 0.0
    %1863 = vmatprep.subr.mxu0 0.0
    %1864 = vmatpush2.xpose.msra.mxu0 0.0
    %1865 = vmatprep.subr.mxu0 0.0
    %1866 = vmatpush2.xpose.msra.mxu0 0.0
    %1867 = vmatprep.subr.mxu0 0.0
    %1868 = vmatpush2.xpose.msra.mxu0 0.0
    %1869 = vmatprep.subr.mxu0 0.0
    %1870 = vmatpush2.xpose.msra.mxu0 0.0
    %1871 = vmatprep.subr.mxu0 0.0
    %1872 = vmatpush2.xpose.msra.mxu0 0.0
    %1873 = vmatprep.subr.mxu0 0.0
    %1874 = vmatpush2.xpose.msra.mxu0 0.0
    %1875 = vmatprep.subr.mxu0 0.0
    %1876 = vmatpush2.xpose.msra.mxu0 0.0
    %1877 = vmatprep.subr.mxu0 0.0
    %1878 = vmatpush2.xpose.msra.mxu0 0.0
    %1879 = vmatprep.mubr.f32.mxu0 0.0
    %1880 = vmatmul.mubr.f32.gmra.mxu0 %v1809
    %v1881 = vpop.f32.mrf.mxu0
    %v1882 = vadd.f32 0.0, %v1881
    %v1883 = vpop.f32.mrf.mxu0
    %1884 = vdwg.mxu0
    %1885 = vrot.lane.b32.xlu0 %v228, 104
    %v1886 = vpop.permute.xlu0 %1885
    %1887 = vrot.lane.b32.xlu0 %v331, 104
    %v1888 = vpop.permute.xlu0 %1887
    %1889 = vrot.lane.b32.xlu0 %v336, 104
    %v1890 = vpop.permute.xlu0 %1889
    %v1891 = vsel %vm531, %v1886, 0
    %v1893 = vsel %vm531, %v1888, 0
    %v1895 = vsel %vm531, %v1890, 0
    %1897 = vmatprep.subr.mxu0 0.0
    %1898 = vmatpush1.xpose.msra.mxu0 0.0
    %1899 = vmatprep.subr.mxu0 0.0
    %1900 = vmatpush1.xpose.msra.mxu0 0.0
    %1901 = vmatprep.subr.mxu0 0.0
    %1902 = vmatpush1.xpose.msra.mxu0 0.0
    %1903 = vmatprep.subr.mxu0 0.0
    %1904 = vmatpush1.xpose.msra.mxu0 0.0
    %1905 = vmatprep.subr.mxu0 0.0
    %1906 = vmatpush1.xpose.msra.mxu0 0.0
    %1907 = vmatprep.subr.mxu0 0.0
    %1908 = vmatpush1.xpose.msra.mxu0 0.0
    %1909 = vmatprep.subr.mxu0 0.0
    %1910 = vmatpush1.xpose.msra.mxu0 0.0
    %1911 = vmatprep.subr.mxu0 0.0
    %1912 = vmatpush1.xpose.msra.mxu0 0.0
    %1913 = vmatprep.subr.mxu0 0.0
    %1914 = vmatpush1.xpose.msra.mxu0 0.0
    %1915 = vmatprep.subr.mxu0 0.0
    %1916 = vmatpush1.xpose.msra.mxu0 0.0
    %1917 = vmatprep.subr.mxu0 0.0
    %1918 = vmatpush1.xpose.msra.mxu0 0.0
    %1919 = vmatprep.subr.mxu0 0.0
    %1920 = vmatpush1.xpose.msra.mxu0 0.0
    %1921 = vmatprep.subr.mxu0 0.0
    %1922 = vmatpush1.xpose.msra.mxu0 0.0
    %1923 = vmatprep.subr.mxu0 0.0
    %1924 = vmatpush1.xpose.msra.mxu0 0.0
    %1925 = vmatprep.subr.mxu0 0.0
    %1926 = vmatpush1.xpose.msra.mxu0 %v1895
    %1927 = vmatprep.subr.mxu0 0.0
    %1928 = vmatpush1.xpose.msra.mxu0 %v1893
    %1929 = vmatprep.subr.mxu0 0.0
    %1930 = vmatpush2.xpose.msra.mxu0 0.0
    %1931 = vmatprep.subr.mxu0 0.0
    %1932 = vmatpush2.xpose.msra.mxu0 0.0
    %1933 = vmatprep.subr.mxu0 0.0
    %1934 = vmatpush2.xpose.msra.mxu0 0.0
    %1935 = vmatprep.subr.mxu0 0.0
    %1936 = vmatpush2.xpose.msra.mxu0 0.0
    %1937 = vmatprep.subr.mxu0 0.0
    %1938 = vmatpush2.xpose.msra.mxu0 0.0
    %1939 = vmatprep.subr.mxu0 0.0
    %1940 = vmatpush2.xpose.msra.mxu0 0.0
    %1941 = vmatprep.subr.mxu0 0.0
    %1942 = vmatpush2.xpose.msra.mxu0 0.0
    %1943 = vmatprep.subr.mxu0 0.0
    %1944 = vmatpush2.xpose.msra.mxu0 0.0
    %1945 = vmatprep.subr.mxu0 0.0
    %1946 = vmatpush2.xpose.msra.mxu0 0.0
    %1947 = vmatprep.subr.mxu0 0.0
    %1948 = vmatpush2.xpose.msra.mxu0 0.0
    %1949 = vmatprep.subr.mxu0 0.0
    %1950 = vmatpush2.xpose.msra.mxu0 0.0
    %1951 = vmatprep.subr.mxu0 0.0
    %1952 = vmatpush2.xpose.msra.mxu0 0.0
    %1953 = vmatprep.subr.mxu0 0.0
    %1954 = vmatpush2.xpose.msra.mxu0 0.0
    %1955 = vmatprep.subr.mxu0 0.0
    %1956 = vmatpush2.xpose.msra.mxu0 0.0
    %1957 = vmatprep.subr.mxu0 0.0
    %1958 = vmatpush2.xpose.msra.mxu0 0.0
    %1959 = vmatprep.subr.mxu0 0.0
    %1960 = vmatpush2.xpose.msra.mxu0 0.0
    %1961 = vmatprep.mubr.f32.mxu0 0.0
    %1962 = vmatmul.mubr.f32.gmra.mxu0 %v1891
    %v1963 = vpop.f32.mrf.mxu0
    %v1964 = vadd.f32 0.0, %v1963
    %v1965 = vpop.f32.mrf.mxu0
    %1966 = vdwg.mxu0
    %v1967 = vmul.f32 %v1882, 0.35355338
    %v1968 = vmul.f32 %v1964, 0.35355338
    %v1969 = vsel %vm149, %v1967, -inf
    %1970 = vmax.xlane.f32.xlu0 %v1969
    %v1971 = vpop.xlane.xlu0 %1970
    %v1972 = vsel %vm149, %v1968, -inf
    %1973 = vmax.xlane.f32.xlu0 %v1972
    %v1974 = vpop.xlane.xlu0 %1973
    %v1975 = vsub.f32 %v1967, %v1971
    %v1976 = vsub.f32 %v1968, %v1974
    %v1977 = vmul.f32 %v1975, 1.442695
    %v1978 = vpow.pop %v1977
    %v1979 = vmul.f32 %v1976, 1.442695
    %v1980 = vpow.pop %v1979
    %v1981 = vsel %vm149, %v1978, 0.0
    %1982 = vadd.xlane.f32.xlu0 %v1981
    %v1983 = vpop.xlane.xlu0 %1982
    %v1984 = vsel %vm149, %v1980, 0.0
    %1985 = vadd.xlane.f32.xlu0 %v1984
    %v1986 = vpop.xlane.xlu0 %1985
    %v1987 = vrcp.pop %v1983
    %v1988 = vmul.f32 %v1978, %v1987
    %v1989 = vrcp.pop %v1986
    %v1990 = vmul.f32 %v1980, %v1989
    %1991 = vrot.lane.b32.xlu0 %v416, 104
    %v1992 = vpop.permute.xlu0 %1991
    %1993 = vrot.lane.b32.xlu0 %v421, 104
    %v1994 = vpop.permute.xlu0 %1993
    %v1998 = vsel %vm149, %v1988, 0
    %2000 = vmatprep.subr.mxu0 0.0
    %2001 = vmatpush1.msra.mxu0 0.0
    %2002 = vmatprep.subr.mxu0 0.0
    %2003 = vmatpush1.msra.mxu0 0.0
    %2004 = vmatprep.subr.mxu0 0.0
    %2005 = vmatpush1.msra.mxu0 0.0
    %2006 = vmatprep.subr.mxu0 0.0
    %2007 = vmatpush1.msra.mxu0 0.0
    %2008 = vmatprep.subr.mxu0 0.0
    %2009 = vmatpush1.msra.mxu0 0.0
    %2010 = vmatprep.subr.mxu0 0.0
    %2011 = vmatpush1.msra.mxu0 0.0
    %2012 = vmatprep.subr.mxu0 0.0
    %2013 = vmatpush1.msra.mxu0 0.0
    %2014 = vmatprep.subr.mxu0 0.0
    %2015 = vmatpush1.msra.mxu0 0.0
    %2016 = vmatprep.subr.mxu0 0.0
    %2017 = vmatpush1.msra.mxu0 0.0
    %2018 = vmatprep.subr.mxu0 0.0
    %2019 = vmatpush1.msra.mxu0 0.0
    %2020 = vmatprep.subr.mxu0 0.0
    %2021 = vmatpush1.msra.mxu0 0.0
    %2022 = vmatprep.subr.mxu0 0.0
    %2023 = vmatpush1.msra.mxu0 0.0
    %2024 = vmatprep.subr.mxu0 0.0
    %2025 = vmatpush1.msra.mxu0 0.0
    %2026 = vmatprep.subr.mxu0 0.0
    %2027 = vmatpush1.msra.mxu0 0.0
    %2028 = vmatprep.subr.mxu0 0.0
    %2029 = vmatpush1.msra.mxu0 %v1994
    %2030 = vmatprep.subr.mxu0 0.0
    %2031 = vmatpush1.msra.mxu0 %v1992
    %2032 = vmatprep.subr.mxu0 0.0
    %2033 = vmatpush2.msra.mxu0 0.0
    %2034 = vmatprep.subr.mxu0 0.0
    %2035 = vmatpush2.msra.mxu0 0.0
    %2036 = vmatprep.subr.mxu0 0.0
    %2037 = vmatpush2.msra.mxu0 0.0
    %2038 = vmatprep.subr.mxu0 0.0
    %2039 = vmatpush2.msra.mxu0 0.0
    %2040 = vmatprep.subr.mxu0 0.0
    %2041 = vmatpush2.msra.mxu0 0.0
    %2042 = vmatprep.subr.mxu0 0.0
    %2043 = vmatpush2.msra.mxu0 0.0
    %2044 = vmatprep.subr.mxu0 0.0
    %2045 = vmatpush2.msra.mxu0 0.0
    %2046 = vmatprep.subr.mxu0 0.0
    %2047 = vmatpush2.msra.mxu0 0.0
    %2048 = vmatprep.subr.mxu0 0.0
    %2049 = vmatpush2.msra.mxu0 0.0
    %2050 = vmatprep.subr.mxu0 0.0
    %2051 = vmatpush2.msra.mxu0 0.0
    %2052 = vmatprep.subr.mxu0 0.0
    %2053 = vmatpush2.msra.mxu0 0.0
    %2054 = vmatprep.subr.mxu0 0.0
    %2055 = vmatpush2.msra.mxu0 0.0
    %2056 = vmatprep.subr.mxu0 0.0
    %2057 = vmatpush2.msra.mxu0 0.0
    %2058 = vmatprep.subr.mxu0 0.0
    %2059 = vmatpush2.msra.mxu0 0.0
    %2060 = vmatprep.subr.mxu0 0.0
    %2061 = vmatpush2.msra.mxu0 0.0
    %2062 = vmatprep.subr.mxu0 0.0
    %2063 = vmatpush2.msra.mxu0 0.0
    %2064 = vmatprep.mubr.f32.mxu0 0.0
    %2065 = vmatmul.mubr.f32.gmra.mxu0 %v1998
    %v2066 = vpop.f32.mrf.mxu0
    %v2067 = vadd.f32 0.0, %v2066
    %v2068 = vpop.f32.mrf.mxu0
    %2069 = vdwg.mxu0
    %2070 = vrot.lane.b32.xlu0 %v426, 104
    %v2071 = vpop.permute.xlu0 %2070
    %2072 = vrot.lane.b32.xlu0 %v431, 104
    %v2073 = vpop.permute.xlu0 %2072
    %v2077 = vsel %vm149, %v1990, 0
    %2079 = vmatprep.subr.mxu0 0.0
    %2080 = vmatpush1.msra.mxu0 0.0
    %2081 = vmatprep.subr.mxu0 0.0
    %2082 = vmatpush1.msra.mxu0 0.0
    %2083 = vmatprep.subr.mxu0 0.0
    %2084 = vmatpush1.msra.mxu0 0.0
    %2085 = vmatprep.subr.mxu0 0.0
    %2086 = vmatpush1.msra.mxu0 0.0
    %2087 = vmatprep.subr.mxu0 0.0
    %2088 = vmatpush1.msra.mxu0 0.0
    %2089 = vmatprep.subr.mxu0 0.0
    %2090 = vmatpush1.msra.mxu0 0.0
    %2091 = vmatprep.subr.mxu0 0.0
    %2092 = vmatpush1.msra.mxu0 0.0
    %2093 = vmatprep.subr.mxu0 0.0
    %2094 = vmatpush1.msra.mxu0 0.0
    %2095 = vmatprep.subr.mxu0 0.0
    %2096 = vmatpush1.msra.mxu0 0.0
    %2097 = vmatprep.subr.mxu0 0.0
    %2098 = vmatpush1.msra.mxu0 0.0
    %2099 = vmatprep.subr.mxu0 0.0
    %2100 = vmatpush1.msra.mxu0 0.0
    %2101 = vmatprep.subr.mxu0 0.0
    %2102 = vmatpush1.msra.mxu0 0.0
    %2103 = vmatprep.subr.mxu0 0.0
    %2104 = vmatpush1.msra.mxu0 0.0
    %2105 = vmatprep.subr.mxu0 0.0
    %2106 = vmatpush1.msra.mxu0 0.0
    %2107 = vmatprep.subr.mxu0 0.0
    %2108 = vmatpush1.msra.mxu0 %v2073
    %2109 = vmatprep.subr.mxu0 0.0
    %2110 = vmatpush1.msra.mxu0 %v2071
    %2111 = vmatprep.subr.mxu0 0.0
    %2112 = vmatpush2.msra.mxu0 0.0
    %2113 = vmatprep.subr.mxu0 0.0
    %2114 = vmatpush2.msra.mxu0 0.0
    %2115 = vmatprep.subr.mxu0 0.0
    %2116 = vmatpush2.msra.mxu0 0.0
    %2117 = vmatprep.subr.mxu0 0.0
    %2118 = vmatpush2.msra.mxu0 0.0
    %2119 = vmatprep.subr.mxu0 0.0
    %2120 = vmatpush2.msra.mxu0 0.0
    %2121 = vmatprep.subr.mxu0 0.0
    %2122 = vmatpush2.msra.mxu0 0.0
    %2123 = vmatprep.subr.mxu0 0.0
    %2124 = vmatpush2.msra.mxu0 0.0
    %2125 = vmatprep.subr.mxu0 0.0
    %2126 = vmatpush2.msra.mxu0 0.0
    %2127 = vmatprep.subr.mxu0 0.0
    %2128 = vmatpush2.msra.mxu0 0.0
    %2129 = vmatprep.subr.mxu0 0.0
    %2130 = vmatpush2.msra.mxu0 0.0
    %2131 = vmatprep.subr.mxu0 0.0
    %2132 = vmatpush2.msra.mxu0 0.0
    %2133 = vmatprep.subr.mxu0 0.0
    %2134 = vmatpush2.msra.mxu0 0.0
    %2135 = vmatprep.subr.mxu0 0.0
    %2136 = vmatpush2.msra.mxu0 0.0
    %2137 = vmatprep.subr.mxu0 0.0
    %2138 = vmatpush2.msra.mxu0 0.0
    %2139 = vmatprep.subr.mxu0 0.0
    %2140 = vmatpush2.msra.mxu0 0.0
    %2141 = vmatprep.subr.mxu0 0.0
    %2142 = vmatpush2.msra.mxu0 0.0
    %2143 = vmatprep.mubr.f32.mxu0 0.0
    %2144 = vmatmul.mubr.f32.gmra.mxu0 %v2077
    %v2145 = vpop.f32.mrf.mxu0
    %v2146 = vadd.f32 0.0, %v2145
    %v2147 = vpop.f32.mrf.mxu0
    %2148 = vdwg.mxu0
    %v2150 = vsel %vm531, %v2067, 0
    %v2153 = vsel %vm531, %v2146, 0
    %2155 = vmatprep.subr.mxu0 0.0
    %2156 = vmatpush1.msra.mxu0 0.0
    %2157 = vmatprep.subr.mxu0 0.0
    %2158 = vmatpush1.msra.mxu0 0.0
    %2159 = vmatprep.subr.mxu0 0.0
    %2160 = vmatpush1.msra.mxu0 0.0
    %2161 = vmatprep.subr.mxu0 0.0
    %2162 = vmatpush1.msra.mxu0 0.0
    %2163 = vmatprep.subr.mxu0 0.0
    %2164 = vmatpush1.msra.mxu0 0.0
    %2165 = vmatprep.subr.mxu0 0.0
    %2166 = vmatpush1.msra.mxu0 0.0
    %2167 = vmatprep.subr.mxu0 0.0
    %2168 = vmatpush1.msra.mxu0 0.0
    %2169 = vmatprep.subr.mxu0 0.0
    %2170 = vmatpush1.msra.mxu0 0.0
    %2171 = vmatprep.subr.mxu0 0.0
    %2172 = vmatpush1.msra.mxu0 0.0
    %2173 = vmatprep.subr.mxu0 0.0
    %2174 = vmatpush1.msra.mxu0 0.0
    %2175 = vmatprep.subr.mxu0 0.0
    %2176 = vmatpush1.msra.mxu0 0.0
    %2177 = vmatprep.subr.mxu0 0.0
    %2178 = vmatpush1.msra.mxu0 0.0
    %2179 = vmatprep.subr.mxu0 0.0
    %2180 = vmatpush1.msra.mxu0 0.0
    %2181 = vmatprep.subr.mxu0 0.0
    %2182 = vmatpush1.msra.mxu0 0.0
    %2183 = vmatprep.subr.mxu0 0.0
    %2184 = vmatpush1.msra.mxu0 0.0
    %2185 = vmatprep.subr.mxu0 0.0
    %2186 = vmatpush1.msra.mxu0 %v530
    %2187 = vmatprep.subr.mxu0 0.0
    %2188 = vmatpush2.msra.mxu0 0.0
    %2189 = vmatprep.subr.mxu0 0.0
    %2190 = vmatpush2.msra.mxu0 0.0
    %2191 = vmatprep.subr.mxu0 0.0
    %2192 = vmatpush2.msra.mxu0 0.0
    %2193 = vmatprep.subr.mxu0 0.0
    %2194 = vmatpush2.msra.mxu0 0.0
    %2195 = vmatprep.subr.mxu0 0.0
    %2196 = vmatpush2.msra.mxu0 0.0
    %2197 = vmatprep.subr.mxu0 0.0
    %2198 = vmatpush2.msra.mxu0 0.0
    %2199 = vmatprep.subr.mxu0 0.0
    %2200 = vmatpush2.msra.mxu0 0.0
    %2201 = vmatprep.subr.mxu0 0.0
    %2202 = vmatpush2.msra.mxu0 0.0
    %2203 = vmatprep.subr.mxu0 0.0
    %2204 = vmatpush2.msra.mxu0 0.0
    %2205 = vmatprep.subr.mxu0 0.0
    %2206 = vmatpush2.msra.mxu0 0.0
    %2207 = vmatprep.subr.mxu0 0.0
    %2208 = vmatpush2.msra.mxu0 0.0
    %2209 = vmatprep.subr.mxu0 0.0
    %2210 = vmatpush2.msra.mxu0 0.0
    %2211 = vmatprep.subr.mxu0 0.0
    %2212 = vmatpush2.msra.mxu0 0.0
    %2213 = vmatprep.subr.mxu0 0.0
    %2214 = vmatpush2.msra.mxu0 0.0
    %2215 = vmatprep.subr.mxu0 0.0
    %2216 = vmatpush2.msra.mxu0 0.0
    %2217 = vmatprep.subr.mxu0 0.0
    %2218 = vmatpush2.msra.mxu0 0.0
    %2219 = vmatprep.mubr.f32.mxu0 0.0
    %2220 = vmatmul.mubr.f32.gmra.mxu0 %v2150
    %v2221 = vpop.f32.mrf.mxu0
    %v2222 = vadd.f32 0.0, %v2221
    %v2223 = vpop.f32.mrf.mxu0
    %2224 = vmatprep.mubr.f32.mxu0 0.0
    %2225 = vmatmul.mubr.f32.gmra.mxu0 %v2153
    %v2226 = vpop.f32.mrf.mxu0
    %v2227 = vadd.f32 0.0, %v2226
    %v2228 = vpop.f32.mrf.mxu0
    %2229 = vdwg.mxu0
    %v2230 = vadd.f32 %v1801, %v2222
    %v2231 = vadd.f32 %v1802, %v2227
    %2232 = vst.msk [vmem:[#allocation14] sm:$0xff] %vm445, %v2230
    %2233 = vst.msk [vmem:[#allocation14 + $0x8] sm:$0xff] %vm445, %v2231
    // Predicated region
    $region74: #{tpu_custom_call.1} parent=1 // pred_check
      _
    $region75: #{tpu_custom_call.1} parent=1 // pred_check_branch
      %2235 = sbr.rel (0) target = $region77
    $region76: #{tpu_custom_call.1} parent=1 // pred_region
      %s2237 = ssub.s32 256, 256
      %2238 = vsyncadd [#allocation4], %s2237
      %s2239 = sshll.u32 [#allocation14], 4
      %s2240 = int_to_ptr.vmem [resolvable:$true] %s2239
      %2245 = dma.vmem_to_hbm [thread:$0]  %s2240, 256, %s11, [#allocation4], 128, 128, 8
    $region77: #{tpu_custom_call.1} parent=1 // pred_fallthru
      _
    // Predicated region
    $region78: #{tpu_custom_call.1} parent=1 // pred_check
      _
    $region79: #{tpu_custom_call.1} parent=1 // pred_check_branch
      %2247 = sbr.rel (0) target = $region81
    $region80: #{tpu_custom_call.1} parent=1 // pred_region
      %2248 = dma.done [#allocation4], 256
    $region81: #{tpu_custom_call.1} parent=1 // pred_fallthru
      _
    %2249 = vsyncpa [#allocation3], 1
    %2250 = vsyncpa [#allocation6], 1
    %2251 = vsyncpa [#allocation9], 1
    %2252 = vsyncpa [#allocation12], 1
    %2253 = vsyncpa [#allocation4], 1

</llo_original>
